<compile_context>
chip_gen: v7x
topology: tpu7x:2x2x1
jax: 0.10.0
libtpu: 0.0.40
codegen_flags: <defaults>
</compile_context>

<pallas_src>
import math

import jax
import jax.numpy as jnp
import numpy as np
from jax.experimental import pallas as pl
from jax.experimental.pallas import tpu as pltpu


def _round_up(x, m):
    return ((x + m - 1) // m) * m


def _cdiv(a, b):
    return -(-a // b)


# ---------------------------------------------------------------------------
# Pallas kernel: manual DMA of the sample span -> K-split windowed DFT matmul
# -> magnitude -> mel matmul.  All matmul dims are multiples of (8, 128).
# ---------------------------------------------------------------------------
def _make_mel_kernel(tm, r, hop, n_hops, n_freq_pad):
    rows = tm + r - 1  # hop-rows needed by a tile of tm frames

    def kernel(wav_hbm, w_ref, fb_ref, out_ref, slab_ref, sem):
        b = pl.program_id(0)
        i = pl.program_id(1)

        # DMA the contiguous span of samples this tile needs:
        # frames [i*tm, i*tm+tm) of batch b cover hop-rows [i*tm, i*tm+tm+r-1).
        row0 = b * n_hops + i * tm
        cp = pltpu.make_async_copy(wav_hbm.at[pl.ds(row0, rows), :], slab_ref, sem)
        cp.start()
        cp.wait()

        # Windowed one-sided real DFT as an r-way K-split matmul against the
        # window-folded [cos | -sin] matrix.  The j-th hop-chunk of every frame
        # in the tile is slab rows [j, j+tm), so frames are never materialized.
        y = jnp.dot(slab_ref[0:tm, :], w_ref[0:hop, :],
                    preferred_element_type=jnp.float32)
        for j in range(1, r):
            y = y + jnp.dot(slab_ref[j:j + tm, :],
                            w_ref[j * hop:(j + 1) * hop, :],
                            preferred_element_type=jnp.float32)

        re = y[:, :n_freq_pad]
        im = y[:, n_freq_pad:]
        mag = jnp.sqrt(re * re + im * im + 1e-6)   # padded bins -> fb rows are 0
        out_ref[...] = jnp.dot(mag, fb_ref[...], preferred_element_type=jnp.float32)

    return kernel


# ---------------------------------------------------------------------------
# Deterministic "parameter" construction (plain numpy)
# ---------------------------------------------------------------------------
def hann_window_periodic(win_length):
    n = np.arange(win_length, dtype=np.float64)
    return 0.5 - 0.5 * np.cos(2.0 * np.pi * n / win_length)   # float64


def melscale_fbanks(n_freqs, n_mels, sample_rate, f_min=0.0, f_max=None):
    # torchaudio.functional.melscale_fbanks, mel_scale="htk", norm=None
    if f_max is None:
        f_max = float(sample_rate) / 2.0
    all_freqs = np.linspace(0.0, sample_rate // 2, n_freqs)

    def hz_to_mel(f):
        return 2595.0 * np.log10(1.0 + f / 700.0)

    def mel_to_hz(m):
        return 700.0 * (10.0 ** (m / 2595.0) - 1.0)

    m_pts = np.linspace(hz_to_mel(f_min), hz_to_mel(f_max), n_mels + 2)
    f_pts = mel_to_hz(m_pts)
    f_diff = f_pts[1:] - f_pts[:-1]                      # (n_mels + 1,)
    slopes = f_pts[None, :] - all_freqs[:, None]         # (n_freqs, n_mels + 2)
    down = (-1.0 * slopes[:, :-2]) / f_diff[:-1]
    up = slopes[:, 2:] / f_diff[1:]
    fb = np.maximum(0.0, np.minimum(down, up))
    return fb                                            # float64 (n_freqs, n_mels)


def build_weights(freq, n_fft, n_mel):
    """Window-folded [cos | -sin] DFT matrix and zero-padded mel filterbank."""
    n_freq = n_fft // 2 + 1
    F = _round_up(n_freq, 128)
    M = _round_up(n_mel, 128)

    win = hann_window_periodic(n_fft)                         # (n_fft,)
    n = np.arange(n_fft, dtype=np.float64)[:, None]
    k = np.arange(n_freq, dtype=np.float64)[None, :]
    ang = 2.0 * np.pi * n * k / n_fft
    cos_w = win[:, None] * np.cos(ang)                        # window folded in
    sin_w = win[:, None] * (-np.sin(ang))

    W = np.zeros((n_fft, 2 * F), dtype=np.float32)
    W[:, :n_freq] = cos_w
    W[:, F:F + n_freq] = sin_w

    fbp = np.zeros((F, M), dtype=np.float32)
    fbp[:n_freq, :n_mel] = melscale_fbanks(n_freq, n_mel, freq)
    return jnp.asarray(W), jnp.asarray(fbp), F, M


# ---------------------------------------------------------------------------
# Full pipeline wrapper
# ---------------------------------------------------------------------------
def audio_pipeline(wav, *, freq, n_fft, n_mel, win_length, hop_length, tm=128):
    assert win_length == n_fft, "module uses win_length == n_fft"
    assert n_fft % hop_length == 0, "in-kernel framing assumes hop | n_fft"
    # TODO(synk): for n_fft % hop_length != 0, fall back to wrapper-side framing.

    B, L = wav.shape
    pad = (n_fft - hop_length) // 2
    r = n_fft // hop_length
    Lp0 = L + 2 * pad
    assert Lp0 >= n_fft
    n_frames = 1 + (Lp0 - n_fft) // hop_length

    W, fbp, F, M = build_weights(freq, n_fft, n_mel)

    tm = min(tm, _round_up(n_frames, 8))
    n_blocks = _cdiv(n_frames, tm)
    n_frames_pad = n_blocks * tm
    n_hops_pad = n_frames_pad + r - 1
    total = n_hops_pad * hop_length

    # zero-pad both sides (torchaudio Spectrogram pad=), then trim/pad the tail
    # so the padded waveform reshapes exactly into (B * n_hops_pad, hop).
    wav_p = jnp.pad(wav.astype(jnp.float32), ((0, 0), (pad, pad)))
    if total <= Lp0:
        wav_p = wav_p[:, :total]
    else:
        wav_p = jnp.pad(wav_p, ((0, 0), (0, total - Lp0)))
    wav2d = wav_p.reshape(B * n_hops_pad, hop_length)         # stays in HBM

    kernel = _make_mel_kernel(tm, r, hop_length, n_hops_pad, F)
    out = pl.pallas_call(
        kernel,
        out_shape=jax.ShapeDtypeStruct((B, n_frames_pad, M), jnp.float32),
        grid=(B, n_blocks),
        in_specs=[
            pl.BlockSpec(memory_space=pl.ANY),                 # raw HBM waveform
            pl.BlockSpec((n_fft, 2 * F), lambda b, i: (0, 0)), # resident weights
            pl.BlockSpec((F, M), lambda b, i: (0, 0)),
        ],
        out_specs=pl.BlockSpec((None, tm, M), lambda b, i: (b, i, 0)),
        scratch_shapes=[
            pltpu.VMEM((tm + r - 1, hop_length), jnp.float32),  # sample slab
            pltpu.SemaphoreType.DMA,
        ],
        compiler_params=pltpu.CompilerParams(
            dimension_semantics=("parallel", "parallel"),
            vmem_limit_bytes=32 * 1024 * 1024,
        ),
    )(wav2d, W, fbp)

    mel = out[:, :n_frames, :n_mel].transpose(0, 2, 1)         # (B, n_mel, T)
    return mel


# ---------------------------------------------------------------------------
# Pure-JAX reference (same math, no Pallas) for a sanity check
# ---------------------------------------------------------------------------
def audio_pipeline_ref(wav, *, freq, n_fft, n_mel, win_length, hop_length):
    B, L = wav.shape
    pad = (n_fft - hop_length) // 2
    n_freq = n_fft // 2 + 1
    window = jnp.asarray(hann_window_periodic(win_length).astype(np.float32))
    fb = jnp.asarray(melscale_fbanks(n_freq, n_mel, freq).astype(np.float32))
    wav_p = jnp.pad(wav.astype(jnp.float32), ((0, 0), (pad, pad)))
    n_frames = 1 + (L + 2 * pad - n_fft) // hop_length
    idx = jnp.arange(n_frames)[:, None] * hop_length + jnp.arange(n_fft)[None, :]
    frames = wav_p[:, idx] * window
    spec = jnp.fft.rfft(frames, n=n_fft, axis=-1)              # (B, T, n_freq)
    mag = jnp.sqrt(jnp.real(spec) ** 2 + jnp.imag(spec) ** 2 + 1e-6)
    mel = jnp.einsum("btf,fm->bmt", mag, fb)
    return mel


if __name__ == "__main__":
    # Small shapes consistent with the module's parameterization
    # (module: freq=48000, n_fft=2048, n_mel=128, hop=512 -> scaled down).
    FREQ, N_FFT, N_MEL, WIN, HOP = 8000, 256, 64, 256, 64
    B, L = 2, 8192

    key = jax.random.PRNGKey(0)
    wav = jax.random.normal(key, (B, L), dtype=jnp.float32)

    mel = audio_pipeline(wav, freq=FREQ, n_fft=N_FFT, n_mel=N_MEL,
                         win_length=WIN, hop_length=HOP)
    mel = jax.block_until_ready(mel)

    ref = audio_pipeline_ref(wav, freq=FREQ, n_fft=N_FFT, n_mel=N_MEL,
                             win_length=WIN, hop_length=HOP)

    n_frames = 1 + (L + 2 * ((N_FFT - HOP) // 2) - N_FFT) // HOP
    assert mel.shape == ref.shape == (B, N_MEL, n_frames), (mel.shape, ref.shape)
    np.testing.assert_allclose(np.asarray(mel), np.asarray(ref), rtol=2e-3, atol=2e-3)

    print("KERNEL_OK")
</pallas_src>

<mosaic_0001>
module attributes {stable_mosaic.version = 11 : i64} {
  func.func @kernel(%arg0: i32, %arg1: i32, %arg2: memref<262x64xf32, #tpu.memory_space<any>>, %arg3: memref<256x512xf32, #tpu.memory_space<vmem>>, %arg4: memref<256x128xf32, #tpu.memory_space<vmem>>, %arg5: memref<1x128x128xf32, #tpu.memory_space<vmem>>, %arg6: memref<131x64xf32, #tpu.memory_space<vmem>>, %arg7: memref<!tpu.dma_semaphore, #tpu.memory_space<semaphore_mem>>) attributes {dimension_semantics = [#tpu.dimension_semantics<parallel>, #tpu.dimension_semantics<parallel>], iteration_bounds = array<i64: 2, 1>, scalar_prefetch = 0 : i64, scratch_operands = 2 : i64, tpu.core_type = #tpu.core_type<tc>, window_params = [{}, {pipeline_mode = #tpu.pipeline_mode<synchronous>, transform_indices = @transform_1, window_bounds = array<i64: 256, 512>}, {pipeline_mode = #tpu.pipeline_mode<synchronous>, transform_indices = @transform_2, window_bounds = array<i64: 256, 128>}, {transform_indices = @transform_3, window_bounds = array<i64: 1, 128, 128>}]} {
    %c131_i32 = arith.constant 131 : i32
    %0 = arith.muli %arg0, %c131_i32 : i32
    %c128_i32 = arith.constant 128 : i32
    %1 = arith.muli %arg1, %c128_i32 : i32
    %2 = arith.addi %0, %1 : i32
    %c0_i32 = arith.constant 0 : i32
    %3 = tpu.memref_slice %arg2[%2, %c0_i32] : memref<262x64xf32, #tpu.memory_space<any>> -> memref<131x64xf32, #tpu.memory_space<any>>
    tpu.enqueue_dma source(%3 : memref<131x64xf32, #tpu.memory_space<any>>) target(%arg6 : memref<131x64xf32, #tpu.memory_space<vmem>>) target_semaphore(%arg7 : memref<!tpu.dma_semaphore, #tpu.memory_space<semaphore_mem>>)
    %c0_i32_0 = arith.constant 0 : i32
    %4 = tpu.memref_slice %arg2[%2, %c0_i32_0] : memref<262x64xf32, #tpu.memory_space<any>> -> memref<131x64xf32, #tpu.memory_space<any>>
    tpu.wait_dma2 semaphore(%arg7 : memref<!tpu.dma_semaphore, #tpu.memory_space<semaphore_mem>>) src(%4 : memref<131x64xf32, #tpu.memory_space<any>>) dst(%arg6 : memref<131x64xf32, #tpu.memory_space<vmem>>)
    %c0 = arith.constant 0 : index
    %c0_1 = arith.constant 0 : index
    %5 = vector.load %arg6[%c0, %c0_1] : memref<131x64xf32, #tpu.memory_space<vmem>>, vector<128x64xf32>
    %c0_2 = arith.constant 0 : index
    %c0_3 = arith.constant 0 : index
    %6 = vector.load %arg3[%c0_2, %c0_3] : memref<256x512xf32, #tpu.memory_space<vmem>>, vector<64x512xf32>
    %cst = arith.constant dense<0.000000e+00> : vector<128x512xf32>
    %7 = tpu.matmul %5, %6, %cst {dimension_numbers = #tpu.dot_dimension_numbers<[1], [0], [0], [1], [0, 0, 1, 1], [], []>} : vector<128x64xf32>, vector<64x512xf32>, vector<128x512xf32> -> vector<128x512xf32>
    %c1 = arith.constant 1 : index
    %c0_4 = arith.constant 0 : index
    %8 = vector.load %arg6[%c1, %c0_4] : memref<131x64xf32, #tpu.memory_space<vmem>>, vector<128x64xf32>
    %c64 = arith.constant 64 : index
    %c0_5 = arith.constant 0 : index
    %9 = vector.load %arg3[%c64, %c0_5] : memref<256x512xf32, #tpu.memory_space<vmem>>, vector<64x512xf32>
    %cst_6 = arith.constant dense<0.000000e+00> : vector<128x512xf32>
    %10 = tpu.matmul %8, %9, %cst_6 {dimension_numbers = #tpu.dot_dimension_numbers<[1], [0], [0], [1], [0, 0, 1, 1], [], []>} : vector<128x64xf32>, vector<64x512xf32>, vector<128x512xf32> -> vector<128x512xf32>
    %11 = arith.addf %7, %10 : vector<128x512xf32>
    %c2 = arith.constant 2 : index
    %c0_7 = arith.constant 0 : index
    %12 = vector.load %arg6[%c2, %c0_7] : memref<131x64xf32, #tpu.memory_space<vmem>>, vector<128x64xf32>
    %c128 = arith.constant 128 : index
    %c0_8 = arith.constant 0 : index
    %13 = vector.load %arg3[%c128, %c0_8] : memref<256x512xf32, #tpu.memory_space<vmem>>, vector<64x512xf32>
    %cst_9 = arith.constant dense<0.000000e+00> : vector<128x512xf32>
    %14 = tpu.matmul %12, %13, %cst_9 {dimension_numbers = #tpu.dot_dimension_numbers<[1], [0], [0], [1], [0, 0, 1, 1], [], []>} : vector<128x64xf32>, vector<64x512xf32>, vector<128x512xf32> -> vector<128x512xf32>
    %15 = arith.addf %11, %14 : vector<128x512xf32>
    %c3 = arith.constant 3 : index
    %c0_10 = arith.constant 0 : index
    %16 = vector.load %arg6[%c3, %c0_10] : memref<131x64xf32, #tpu.memory_space<vmem>>, vector<128x64xf32>
    %c192 = arith.constant 192 : index
    %c0_11 = arith.constant 0 : index
    %17 = vector.load %arg3[%c192, %c0_11] : memref<256x512xf32, #tpu.memory_space<vmem>>, vector<64x512xf32>
    %cst_12 = arith.constant dense<0.000000e+00> : vector<128x512xf32>
    %18 = tpu.matmul %16, %17, %cst_12 {dimension_numbers = #tpu.dot_dimension_numbers<[1], [0], [0], [1], [0, 0, 1, 1], [], []>} : vector<128x64xf32>, vector<64x512xf32>, vector<128x512xf32> -> vector<128x512xf32>
    %19 = arith.addf %15, %18 : vector<128x512xf32>
    %20 = vector.extract_strided_slice %19 {offsets = [0, 0], sizes = [128, 256], strides = [1, 1]} : vector<128x512xf32> to vector<128x256xf32>
    %21 = vector.extract_strided_slice %19 {offsets = [0, 256], sizes = [128, 256], strides = [1, 1]} : vector<128x512xf32> to vector<128x256xf32>
    %22 = arith.mulf %20, %20 : vector<128x256xf32>
    %23 = arith.mulf %21, %21 : vector<128x256xf32>
    %24 = arith.addf %22, %23 : vector<128x256xf32>
    %cst_13 = arith.constant 9.99999997E-7 : f32
    %25 = vector.broadcast %cst_13 : f32 to vector<128x256xf32>
    %26 = arith.addf %24, %25 : vector<128x256xf32>
    %27 = math.sqrt %26 : vector<128x256xf32>
    %c0_14 = arith.constant 0 : index
    %c0_15 = arith.constant 0 : index
    %28 = vector.load %arg4[%c0_14, %c0_15] : memref<256x128xf32, #tpu.memory_space<vmem>>, vector<256x128xf32>
    %cst_16 = arith.constant dense<0.000000e+00> : vector<128x128xf32>
    %29 = tpu.matmul %27, %28, %cst_16 {dimension_numbers = #tpu.dot_dimension_numbers<[1], [0], [0], [1], [0, 0, 1, 1], [], []>} : vector<128x256xf32>, vector<256x128xf32>, vector<128x128xf32> -> vector<128x128xf32>
    %c0_17 = arith.constant 0 : index
    %c0_18 = arith.constant 0 : index
    %c0_19 = arith.constant 0 : index
    %30 = vector.load %arg5[%c0_17, %c0_18, %c0_19] : memref<1x128x128xf32, #tpu.memory_space<vmem>>, vector<1x128x128xf32>
    %31 = vector.shape_cast %30 : vector<1x128x128xf32> to vector<128x128xf32>
    %32 = vector.shape_cast %29 : vector<128x128xf32> to vector<1x128x128xf32>
    tpu.vector_store %arg5[%c0_17, %c0_18, %c0_19], %32 {strides = array<i32>} : memref<1x128x128xf32, #tpu.memory_space<vmem>>, vector<1x128x128xf32>,
    return
  }
  func.func @transform_1(%arg0: i32, %arg1: i32) -> (i32, i32) {
    %c0_i32 = arith.constant 0 : i32
    %c0_i32_0 = arith.constant 0 : i32
    %c0_i32_1 = arith.constant 0 : i32
    return %c0_i32, %c0_i32_0 : i32, i32
  }
  func.func @transform_2(%arg0: i32, %arg1: i32) -> (i32, i32) {
    %c0_i32 = arith.constant 0 : i32
    %c0_i32_0 = arith.constant 0 : i32
    %c0_i32_1 = arith.constant 0 : i32
    return %c0_i32, %c0_i32_0 : i32, i32
  }
  func.func @transform_3(%arg0: i32, %arg1: i32) -> (i32, i32, i32) {
    %c0_i32 = arith.constant 0 : i32
    %c0_i32_0 = arith.constant 0 : i32
    return %arg0, %arg1, %c0_i32 : i32, i32, i32
  }
}

</mosaic_0001>

<llo_original>
// kernel: tpu_custom_call.1
$region0: #{tpu_custom_call.1}
  #allocation0 [shape = 'u32[]', space=smem, size = 0x4, offset = 0x4, fixed_abs, tag = 'smem constant byte address 0x4 - core index']
  #allocation1 [shape = 'u32[144,128]{1,0:T(1,128)}', space=vmem, size = 0x12000, scoped, tag = 'internal scratch']
  #allocation2 [shape = 'f32[131,64]{1,0:T(8,128)}', space=vmem, size = 0x11000, scoped, tag = 'scratch operand']
  #allocation3 [shape = 's32[1]{0}', space=sflag, size = 0x4, scoped, tag = 'scratch operand']
  #allocation8 [shape = 's32[]', space=sflag, size = 0x4, offset = 0, fixed_abs, tag = 'sflag constant byte address 0x0 - dummy sync flag']
  %s0 = inlined_call_operand.vmem [shape: f32[262,64], index: 0, kind: input, shape index: {}]
  %s1 = inlined_call_operand.hbm [shape: f32[256,512], index: 1, kind: input, shape index: {}]
  %s2 = inlined_call_operand.vmem [shape: f32[256,128], index: 2, kind: input, shape index: {}]
  %s3 = inlined_call_operand.hbm [shape: f32[2,128,128], index: 3, kind: output, shape index: {}]
  %s4 = sld [smem:[#allocation0]]
  $region82: #{tpu_custom_call.1} parent=0
    _
  %s6 = ssub.s32 1, %s4
  %s7 = scalar_select 0, %s6, %s4
  $region1: #{tpu_custom_call.1} parent=0
    #allocation4 [shape = 'u8[524288]{0}', space=vmem, size = 0x80000, scoped, tag = 'input window, operand 1, single buffered']
    #allocation5 [shape = 's32[2]{0}', space=sflag, size = 0x8, scoped, tag = 'scoped memory for tpu_custom_call.1']
    #allocation6 [shape = 's32[2]{0}', space=sflag, size = 0x8, scoped, tag = 'scoped memory for tpu_custom_call.1']
    #allocation7 [shape = 'u8[131072]{0}', space=vmem, size = 0x20000, scoped, tag = 'output window, operand 0']
    %8 = vsyncpa [#allocation5], 0
    %9 = vsyncpa [#allocation6], 0
    %s10 = scalar_lea.sflag [#allocation6], 1
    %11 = vsyncpa %s10, 0
    loop: start=0, step=1, limit=4
    $region2: #{tpu_custom_call.1} parent=1 // loop_pre_header
      _
    $region3: #{tpu_custom_call.1} parent=1 // loop_header
      %s13 = sphi 0, %s17
      %p14 = scmp.ge.s32.totalorder %s13, 4
      %s20 = sphi 0, %s32
      %s21 = sphi 0, %s28
      %s22 = sphi 0, %s20
      %s23 = sphi 0, %s21
      %s24 = sphi 0, %s22
      %s25 = sphi 0, %s23
      %s33 = sphi 0, %s33
      %s35 = sphi 0, %s33
      %s36 = sphi 0, %s35
      %s50 = sphi 0, %s36
      %s54 = sphi 0, %s54
      %s56 = sphi 0, %s54
      %s57 = sphi 0, %s56
      %s71 = sphi 0, %s57
      %s79 = sphi 0, %s81
      %s82 = sphi 0, %s79
      %s83 = sphi 0, %s82
      %s99 = sphi 0, %s83
    $region4: #{tpu_custom_call.1} parent=1 // loop_header_branch
      %16 = sbr.rel (%p14) target = $region8
    $region5: #{tpu_custom_call.1} parent=1 // loop_body
      %s18 = ssub.s32 %s13, 1
      %s19 = ssub.s32 %s13, 2
      %s26 = sadd.s32 1, %s21
      %p27 = scmp.ge.s32.totalorder %s26, 1
      %s28 = scalar_select %p27, 0, %s26
      %s29 = sadd.s32 1, %s20
      %s30 = scalar_select %p27, %s29, %s20
      %p31 = scmp.ge.s32.totalorder %s30, 2
      %s32 = scalar_select %p31, 0, %s30
      %s34 = sadd.s32 %s33, 1
      %p37 = scmp.eq.s32.totalorder %s13, 1
      %p38 = scmp.ne.s32.totalorder %s33, %s35
      %p39 = scmp.eq.s32.totalorder %s13, 0
      %p40 = por %p38, %p39
      %p41 = scmp.ne.s32.totalorder %s33, %s35
      %p42 = scmp.eq.s32.totalorder %s18, 1
      %p43 = por %p41, %p42
      %p44 = scmp.ne.s32.totalorder %s35, %s36
      %p45 = scmp.eq.s32.totalorder %s18, 0
      %p46 = por %p44, %p45
      %p47 = scmp.ne.s32.totalorder %s35, %s36
      %p48 = scmp.eq.s32.totalorder %s19, 1
      %p49 = por %p47, %p48
      %p51 = scmp.ne.s32.totalorder %s36, %s50
      %p52 = scmp.eq.s32.totalorder %s19, 0
      %p53 = por %p51, %p52
      %s55 = sadd.s32 %s54, 1
      %p58 = scmp.eq.s32.totalorder %s13, 1
      %p59 = scmp.ne.s32.totalorder %s54, %s56
      %p60 = scmp.eq.s32.totalorder %s13, 0
      %p61 = por %p59, %p60
      %p62 = scmp.ne.s32.totalorder %s54, %s56
      %p63 = scmp.eq.s32.totalorder %s18, 1
      %p64 = por %p62, %p63
      %p65 = scmp.ne.s32.totalorder %s56, %s57
      %p66 = scmp.eq.s32.totalorder %s18, 0
      %p67 = por %p65, %p66
      %p68 = scmp.ne.s32.totalorder %s56, %s57
      %p69 = scmp.eq.s32.totalorder %s19, 1
      %p70 = por %p68, %p69
      %p72 = scmp.ne.s32.totalorder %s57, %s71
      %p73 = scmp.eq.s32.totalorder %s19, 0
      %p74 = por %p72, %p73
      %s75 = ssub.s32 %s20, %s32
      %s76 = ssub.s32 %s21, %s28
      %s77 = sor.u32 %s75, %s76
      %p78 = scmp.eq.s32.totalorder %s77, 0
      %s80 = sadd.s32 %s79, 1
      %s81 = scalar_select %p78, %s79, %s80
      %p84 = pneg %p78
      %p85 = scmp.eq.s32.totalorder %s13, 1
      %p86 = por %p84, %p85
      %p87 = scmp.ne.s32.totalorder %s79, %s82
      %p88 = scmp.eq.s32.totalorder %s13, 0
      %p89 = por %p87, %p88
      %p90 = scmp.ne.s32.totalorder %s79, %s82
      %p91 = scmp.eq.s32.totalorder %s18, 1
      %p92 = por %p90, %p91
      %p93 = scmp.ne.s32.totalorder %s82, %s83
      %p94 = scmp.eq.s32.totalorder %s18, 0
      %p95 = por %p93, %p94
      %p96 = scmp.ne.s32.totalorder %s82, %s83
      %p97 = scmp.eq.s32.totalorder %s19, 1
      %p98 = por %p96, %p97
      %p100 = scmp.ne.s32.totalorder %s83, %s99
      %p101 = scmp.eq.s32.totalorder %s19, 0
      %p102 = por %p100, %p101
      %p103 = scmp.le.s32.totalorder 1, %s13
      %p104 = scmp.lt.s32.totalorder %s13, 3
      %p105 = pnand %p103, %p104
      %p106 = pneg %p105
      // Predicated region
      $region9: #{tpu_custom_call.1} parent=5 // pred_check
        _
      $region10: #{tpu_custom_call.1} parent=5 // pred_check_branch
        %108 = sbr.rel (%p105) target = $region12
      $region11: #{tpu_custom_call.1} parent=5 // pred_region
        %s109 = ssub.s32 %s13, 1
        // Predicated region
        $region13: #{tpu_custom_call.1} parent=11 // pred_check
          %p110 = pneg %p46
        $region14: #{tpu_custom_call.1} parent=11 // pred_check_branch
          %112 = sbr.rel (%p110) target = $region16
        $region15: #{tpu_custom_call.1} parent=11 // pred_region
          %s114 = ssub.s32 16384, 16384
          %115 = vsyncadd [#allocation5], %s114
          %s116 = sshll.u32 [#allocation4], 4
          %s117 = int_to_ptr.vmem [resolvable:$true] %s116
          %122 = dma.hbm_to_vmem [thread:$0]  %s1, 16384, %s117, [#allocation5], 512, 512, 32
        $region16: #{tpu_custom_call.1} parent=11 // pred_fallthru
          _
        // Predicated region
        $region17: #{tpu_custom_call.1} parent=11 // pred_check
          %p123 = pneg %p67
        $region18: #{tpu_custom_call.1} parent=11 // pred_check_branch
          %125 = sbr.rel (%p123) target = $region20
        $region19: #{tpu_custom_call.1} parent=11 // pred_region
          _
        $region20: #{tpu_custom_call.1} parent=11 // pred_fallthru
          _
      $region12: #{tpu_custom_call.1} parent=5 // pred_fallthru
        _
      %p126 = scmp.lt.s32.totalorder %s13, 2
      // Predicated region
      $region21: #{tpu_custom_call.1} parent=5 // pred_check
        %p127 = pneg %p126
      $region22: #{tpu_custom_call.1} parent=5 // pred_check_branch
        %129 = sbr.rel (%p127) target = $region24
      $region23: #{tpu_custom_call.1} parent=5 // pred_region
        _
      $region24: #{tpu_custom_call.1} parent=5 // pred_fallthru
        _
      %p130 = scmp.le.s32.totalorder 1, %s13
      %p131 = scmp.lt.s32.totalorder %s13, 3
      %p132 = pnand %p130, %p131
      %p133 = pneg %p132
      // Predicated region
      $region25: #{tpu_custom_call.1} parent=5 // pred_check
        _
      $region26: #{tpu_custom_call.1} parent=5 // pred_check_branch
        %135 = sbr.rel (%p132) target = $region28
      $region27: #{tpu_custom_call.1} parent=5 // pred_region
        %s136 = ssub.s32 %s13, 1
        // Predicated region
        $region29: #{tpu_custom_call.1} parent=27 // pred_check
          %p137 = pneg %p46
        $region30: #{tpu_custom_call.1} parent=27 // pred_check_branch
          %139 = sbr.rel (%p137) target = $region32
        $region31: #{tpu_custom_call.1} parent=27 // pred_region
          %140 = dma.done [#allocation5], 16384
        $region32: #{tpu_custom_call.1} parent=27 // pred_fallthru
          _
        %p141 = pneg %p46
        %p142 = pneg %p43
        %p143 = pneg %p67
        %p144 = pneg %p64
        %p145 = pneg %p95
        %p146 = pneg %p92
        %s147 = sand.u32 %s82, 1
        %s148 = scalar_lea.sflag [#allocation6], %s147
        %s149 = sand.u32 %s82, 1
        %s150 = smul.addr %s149, 128
        %s151 = scalar_lea.vmem [#allocation7], %s150
        %s152 = smul.u32 16, %s23
        %s153 = smul.u32 %s22, 131
        %s154 = smul.u32 %s23, 128
        %s155 = sadd.s32 %s153, %s154
        %s156 = scalar_lea.vmem %s0, %s155
        %p158 = scmp.lt.u32.totalorder 131, 8
        %p159 = pneg %p158
        // Predicated region
        $region33: #{tpu_custom_call.1} parent=27 // pred_check
          _
        $region34: #{tpu_custom_call.1} parent=27 // pred_check_branch
          %161 = sbr.rel (%p158) target = $region36
        $region35: #{tpu_custom_call.1} parent=27 // pred_region
          %s176 = sand.u32 131, 7
          %p177 = scmp.eq.s32.totalorder %s176, 0
          %p178 = pneg %p177
          // Predicated region
          $region48: #{tpu_custom_call.1} parent=35 // pred_check
            _
          $region49: #{tpu_custom_call.1} parent=35 // pred_check_branch
            %180 = sbr.rel (%p177) target = $region51
          $region50: #{tpu_custom_call.1} parent=35 // pred_region
            %s181 = sand.u32 131, 7
            %s182 = ssub.s32 131, %s181
            %s183 = scalar_lea.vmem %s156, %s182
            %s184 = ssub.s32 131, %s181
            %s185 = scalar_lea.vmem [#allocation2], %s184
            loop: start=0, step=1, limit=1
            $region52: #{tpu_custom_call.1} parent=50 // loop_pre_header
              _
            $region53: #{tpu_custom_call.1} parent=50 // loop_header
              %s187 = sphi 0, %s191
              %p188 = scmp.ge.s32.totalorder %s187, 1
              %s192 = sphi %s156, %s156
              %s193 = sphi [#allocation2], [#allocation2]
            $region54: #{tpu_custom_call.1} parent=50 // loop_header_branch
              %190 = sbr.rel (%p188) target = $region58
            $region55: #{tpu_custom_call.1} parent=50 // loop_body
              %v194 = vld [vmem:[%s192] sm:$0xff]
              %195 = vst [vmem:[%s193] sm:$0xff] %v194
              %v196 = vld [vmem:[%s192 + $0x8] sm:$0xff]
              %197 = vst [vmem:[%s193 + $0x8] sm:$0xff] %v196
              %v198 = vld [vmem:[%s192 + $0x10] sm:$0xff]
              %199 = vst [vmem:[%s193 + $0x10] sm:$0xff] %v198
              %v200 = vld [vmem:[%s192 + $0x18] sm:$0xff]
              %201 = vst [vmem:[%s193 + $0x18] sm:$0xff] %v200
              %v202 = vld [vmem:[%s192 + $0x20] sm:$0xff]
              %203 = vst [vmem:[%s193 + $0x20] sm:$0xff] %v202
              %v204 = vld [vmem:[%s192 + $0x28] sm:$0xff]
              %205 = vst [vmem:[%s193 + $0x28] sm:$0xff] %v204
              %v206 = vld [vmem:[%s192 + $0x30] sm:$0xff]
              %207 = vst [vmem:[%s193 + $0x30] sm:$0xff] %v206
              %v208 = vld [vmem:[%s192 + $0x38] sm:$0xff]
              %209 = vst [vmem:[%s193 + $0x38] sm:$0xff] %v208
              %v210 = vld [vmem:[%s192 + $0x40] sm:$0xff]
              %211 = vst [vmem:[%s193 + $0x40] sm:$0xff] %v210
              %v212 = vld [vmem:[%s192 + $0x48] sm:$0xff]
              %213 = vst [vmem:[%s193 + $0x48] sm:$0xff] %v212
              %v214 = vld [vmem:[%s192 + $0x50] sm:$0xff]
              %215 = vst [vmem:[%s193 + $0x50] sm:$0xff] %v214
              %v216 = vld [vmem:[%s192 + $0x58] sm:$0xff]
              %217 = vst [vmem:[%s193 + $0x58] sm:$0xff] %v216
              %v218 = vld [vmem:[%s192 + $0x60] sm:$0xff]
              %219 = vst [vmem:[%s193 + $0x60] sm:$0xff] %v218
              %v220 = vld [vmem:[%s192 + $0x68] sm:$0xff]
              %221 = vst [vmem:[%s193 + $0x68] sm:$0xff] %v220
              %v222 = vld [vmem:[%s192 + $0x70] sm:$0xff]
              %223 = vst [vmem:[%s193 + $0x70] sm:$0xff] %v222
              %v224 = vld [vmem:[%s192 + $0x78] sm:$0xff]
              %225 = vst [vmem:[%s193 + $0x78] sm:$0xff] %v224
            $region56: #{tpu_custom_call.1} parent=50 // loop_footer
              %s191 = sadd.s32 1, %s187
            $region57: #{tpu_custom_call.1} parent=50 // loop_footer_branch
              %186 = sbr.rel target = $region53
            $region58: #{tpu_custom_call.1} parent=50 // loop_exit
              _
            %s226 = sshllo.u32 0, %s181
            loop: start=0, step=1, limit=1
            $region59: #{tpu_custom_call.1} parent=50 // loop_pre_header
              _
            $region60: #{tpu_custom_call.1} parent=50 // loop_header
              %s228 = sphi 0, %s232
              %p229 = scmp.ge.s32.totalorder %s228, 1
              %s233 = sphi %s183, %s183
              %s234 = sphi %s185, %s185
            $region61: #{tpu_custom_call.1} parent=50 // loop_header_branch
              %231 = sbr.rel (%p229) target = $region65
            $region62: #{tpu_custom_call.1} parent=50 // loop_body
              %v235 = vld [vmem:[%s233] sm:%s226]
              %236 = vst [vmem:[%s234] sm:%s226] %v235
            $region63: #{tpu_custom_call.1} parent=50 // loop_footer
              %s232 = sadd.s32 1, %s228
            $region64: #{tpu_custom_call.1} parent=50 // loop_footer_branch
              %227 = sbr.rel target = $region60
            $region65: #{tpu_custom_call.1} parent=50 // loop_exit
              _
          $region51: #{tpu_custom_call.1} parent=35 // pred_fallthru
            _
        $region36: #{tpu_custom_call.1} parent=27 // pred_fallthru
          _
        // Predicated region
        $region37: #{tpu_custom_call.1} parent=27 // pred_check
          %p162 = pneg %p158
        $region38: #{tpu_custom_call.1} parent=27 // pred_check_branch
          %164 = sbr.rel (%p162) target = $region40
        $region39: #{tpu_custom_call.1} parent=27 // pred_region
          %s165 = sshllo.u32 0, 131
          loop: start=0, step=1, limit=1
          $region41: #{tpu_custom_call.1} parent=39 // loop_pre_header
            _
          $region42: #{tpu_custom_call.1} parent=39 // loop_header
            %s167 = sphi 0, %s171
            %p168 = scmp.ge.s32.totalorder %s167, 1
            %s172 = sphi %s156, %s156
            %s173 = sphi [#allocation2], [#allocation2]
          $region43: #{tpu_custom_call.1} parent=39 // loop_header_branch
            %170 = sbr.rel (%p168) target = $region47
          $region44: #{tpu_custom_call.1} parent=39 // loop_body
            %v174 = vld [vmem:[%s172] sm:%s165]
            %175 = vst [vmem:[%s173] sm:%s165] %v174
          $region45: #{tpu_custom_call.1} parent=39 // loop_footer
            %s171 = sadd.s32 1, %s167
          $region46: #{tpu_custom_call.1} parent=39 // loop_footer_branch
            %166 = sbr.rel target = $region42
          $region47: #{tpu_custom_call.1} parent=39 // loop_exit
            _
        $region40: #{tpu_custom_call.1} parent=27 // pred_fallthru
          _
        // Predicated region
        $region66: #{tpu_custom_call.1} parent=27 // pred_check
          _
        $region67: #{tpu_custom_call.1} parent=27 // pred_check_branch
          %239 = sbr.rel (0) target = $region69
        $region68: #{tpu_custom_call.1} parent=27 // pred_region
          %240 = vsyncadd [#allocation3], 2096
        $region69: #{tpu_custom_call.1} parent=27 // pred_fallthru
          _
        %s241 = smul.u32 131, 1
        %s242 = sshll.u32 %s241, 4
        %243 = dma.done [#allocation3], %s242
        %v244 = vld [vmem:[#allocation2] sm:$0xff]
        %v245 = vld [vmem:[#allocation2 + $0x8] sm:$0xff]
        %v246 = vld [vmem:[#allocation2 + $0x10] sm:$0xff]
        %v247 = vld [vmem:[#allocation2 + $0x18] sm:$0xff]
        %v248 = vld [vmem:[#allocation2 + $0x20] sm:$0xff]
        %v249 = vld [vmem:[#allocation2 + $0x28] sm:$0xff]
        %v250 = vld [vmem:[#allocation2 + $0x30] sm:$0xff]
        %v251 = vld [vmem:[#allocation2 + $0x38] sm:$0xff]
        %v252 = vld [vmem:[#allocation2 + $0x40] sm:$0xff]
        %v253 = vld [vmem:[#allocation2 + $0x48] sm:$0xff]
        %v254 = vld [vmem:[#allocation2 + $0x50] sm:$0xff]
        %v255 = vld [vmem:[#allocation2 + $0x58] sm:$0xff]
        %v256 = vld [vmem:[#allocation2 + $0x60] sm:$0xff]
        %v257 = vld [vmem:[#allocation2 + $0x68] sm:$0xff]
        %v258 = vld [vmem:[#allocation2 + $0x70] sm:$0xff]
        %v259 = vld [vmem:[#allocation2 + $0x78] sm:$0xff]
        %v260 = vld [vmem:[#allocation4] sm:$0xff]
        %v261 = vld [vmem:[#allocation4 + $0x8] sm:$0xff]
        %v262 = vld [vmem:[#allocation4 + $0x10] sm:$0xff]
        %v263 = vld [vmem:[#allocation4 + $0x18] sm:$0xff]
        %v264 = vld [vmem:[#allocation4 + $0x20] sm:$0xff]
        %v265 = vld [vmem:[#allocation4 + $0x28] sm:$0xff]
        %v266 = vld [vmem:[#allocation4 + $0x30] sm:$0xff]
        %v267 = vld [vmem:[#allocation4 + $0x38] sm:$0xff]
        %v268 = vld [vmem:[#allocation4 + $0x40] sm:$0xff]
        %v269 = vld [vmem:[#allocation4 + $0x48] sm:$0xff]
        %v270 = vld [vmem:[#allocation4 + $0x50] sm:$0xff]
        %v271 = vld [vmem:[#allocation4 + $0x58] sm:$0xff]
        %v272 = vld [vmem:[#allocation4 + $0x60] sm:$0xff]
        %v273 = vld [vmem:[#allocation4 + $0x68] sm:$0xff]
        %v274 = vld [vmem:[#allocation4 + $0x70] sm:$0xff]
        %v275 = vld [vmem:[#allocation4 + $0x78] sm:$0xff]
        %v276 = vld [vmem:[#allocation4 + $0x80] sm:$0xff]
        %v277 = vld [vmem:[#allocation4 + $0x88] sm:$0xff]
        %v278 = vld [vmem:[#allocation4 + $0x90] sm:$0xff]
        %v279 = vld [vmem:[#allocation4 + $0x98] sm:$0xff]
        %v280 = vld [vmem:[#allocation4 + $0xa0] sm:$0xff]
        %v281 = vld [vmem:[#allocation4 + $0xa8] sm:$0xff]
        %v282 = vld [vmem:[#allocation4 + $0xb0] sm:$0xff]
        %v283 = vld [vmem:[#allocation4 + $0xb8] sm:$0xff]
        %v284 = vld [vmem:[#allocation4 + $0xc0] sm:$0xff]
        %v285 = vld [vmem:[#allocation4 + $0xc8] sm:$0xff]
        %v286 = vld [vmem:[#allocation4 + $0xd0] sm:$0xff]
        %v287 = vld [vmem:[#allocation4 + $0xd8] sm:$0xff]
        %v288 = vld [vmem:[#allocation4 + $0xe0] sm:$0xff]
        %v289 = vld [vmem:[#allocation4 + $0xe8] sm:$0xff]
        %v290 = vld [vmem:[#allocation4 + $0xf0] sm:$0xff]
        %v291 = vld [vmem:[#allocation4 + $0xf8] sm:$0xff]
        %v292 = vld [vmem:[#allocation2 + $0x1] sm:$0xff]
        %v293 = vld [vmem:[#allocation2 + $0x9] sm:$0xff]
        %v294 = vld [vmem:[#allocation2 + $0x11] sm:$0xff]
        %v295 = vld [vmem:[#allocation2 + $0x19] sm:$0xff]
        %v296 = vld [vmem:[#allocation2 + $0x21] sm:$0xff]
        %v297 = vld [vmem:[#allocation2 + $0x29] sm:$0xff]
        %v298 = vld [vmem:[#allocation2 + $0x31] sm:$0xff]
        %v299 = vld [vmem:[#allocation2 + $0x39] sm:$0xff]
        %v300 = vld [vmem:[#allocation2 + $0x41] sm:$0xff]
        %v301 = vld [vmem:[#allocation2 + $0x49] sm:$0xff]
        %v302 = vld [vmem:[#allocation2 + $0x51] sm:$0xff]
        %v303 = vld [vmem:[#allocation2 + $0x59] sm:$0xff]
        %v304 = vld [vmem:[#allocation2 + $0x61] sm:$0xff]
        %v305 = vld [vmem:[#allocation2 + $0x69] sm:$0xff]
        %v306 = vld [vmem:[#allocation2 + $0x71] sm:$0xff]
        %v307 = vld [vmem:[#allocation2 + $0x79] sm:$0xff]
        %v308 = vld [vmem:[#allocation4 + $0x100] sm:$0xff]
        %v309 = vld [vmem:[#allocation4 + $0x108] sm:$0xff]
        %v310 = vld [vmem:[#allocation4 + $0x110] sm:$0xff]
        %v311 = vld [vmem:[#allocation4 + $0x118] sm:$0xff]
        %v312 = vld [vmem:[#allocation4 + $0x120] sm:$0xff]
        %v313 = vld [vmem:[#allocation4 + $0x128] sm:$0xff]
        %v314 = vld [vmem:[#allocation4 + $0x130] sm:$0xff]
        %v315 = vld [vmem:[#allocation4 + $0x138] sm:$0xff]
        %v316 = vld [vmem:[#allocation4 + $0x140] sm:$0xff]
        %v317 = vld [vmem:[#allocation4 + $0x148] sm:$0xff]
        %v318 = vld [vmem:[#allocation4 + $0x150] sm:$0xff]
        %v319 = vld [vmem:[#allocation4 + $0x158] sm:$0xff]
        %v320 = vld [vmem:[#allocation4 + $0x160] sm:$0xff]
        %v321 = vld [vmem:[#allocation4 + $0x168] sm:$0xff]
        %v322 = vld [vmem:[#allocation4 + $0x170] sm:$0xff]
        %v323 = vld [vmem:[#allocation4 + $0x178] sm:$0xff]
        %v324 = vld [vmem:[#allocation4 + $0x180] sm:$0xff]
        %v325 = vld [vmem:[#allocation4 + $0x188] sm:$0xff]
        %v326 = vld [vmem:[#allocation4 + $0x190] sm:$0xff]
        %v327 = vld [vmem:[#allocation4 + $0x198] sm:$0xff]
        %v328 = vld [vmem:[#allocation4 + $0x1a0] sm:$0xff]
        %v329 = vld [vmem:[#allocation4 + $0x1a8] sm:$0xff]
        %v330 = vld [vmem:[#allocation4 + $0x1b0] sm:$0xff]
        %v331 = vld [vmem:[#allocation4 + $0x1b8] sm:$0xff]
        %v332 = vld [vmem:[#allocation4 + $0x1c0] sm:$0xff]
        %v333 = vld [vmem:[#allocation4 + $0x1c8] sm:$0xff]
        %v334 = vld [vmem:[#allocation4 + $0x1d0] sm:$0xff]
        %v335 = vld [vmem:[#allocation4 + $0x1d8] sm:$0xff]
        %v336 = vld [vmem:[#allocation4 + $0x1e0] sm:$0xff]
        %v337 = vld [vmem:[#allocation4 + $0x1e8] sm:$0xff]
        %v338 = vld [vmem:[#allocation4 + $0x1f0] sm:$0xff]
        %v339 = vld [vmem:[#allocation4 + $0x1f8] sm:$0xff]
        %vm340 = vcmask 523264
        %v342 = vsel %vm340, %v292, 0
        %v345 = vsel %vm340, %v293, 0
        %v348 = vsel %vm340, %v294, 0
        %v351 = vsel %vm340, %v295, 0
        %v354 = vsel %vm340, %v296, 0
        %v357 = vsel %vm340, %v297, 0
        %v360 = vsel %vm340, %v298, 0
        %v363 = vsel %vm340, %v299, 0
        %v366 = vsel %vm340, %v300, 0
        %v369 = vsel %vm340, %v301, 0
        %v372 = vsel %vm340, %v302, 0
        %v375 = vsel %vm340, %v303, 0
        %v378 = vsel %vm340, %v304, 0
        %v381 = vsel %vm340, %v305, 0
        %v384 = vsel %vm340, %v306, 0
        %v387 = vsel %vm340, %v307, 0
        %389 = vmatprep.subr.mxu0 %v309
        %390 = vmatpush1.msra.mxu0 %v308
        %391 = vmatprep.subr.mxu0 %v313
        %392 = vmatpush1.msra.mxu0 %v312
        %393 = vmatprep.subr.mxu0 %v317
        %394 = vmatpush1.msra.mxu0 %v316
        %395 = vmatprep.subr.mxu0 %v321
        %396 = vmatpush1.msra.mxu0 %v320
        %397 = vmatprep.subr.mxu0 %v325
        %398 = vmatpush1.msra.mxu0 %v324
        %399 = vmatprep.subr.mxu0 %v329
        %400 = vmatpush1.msra.mxu0 %v328
        %401 = vmatprep.subr.mxu0 %v333
        %402 = vmatpush1.msra.mxu0 %v332
        %403 = vmatprep.subr.mxu0 %v337
        %404 = vmatpush1.msra.mxu0 %v336
        %405 = vmatprep.subr.mxu0 0.0
        %406 = vmatpush1.msra.mxu0 0.0
        %407 = vmatprep.subr.mxu0 0.0
        %408 = vmatpush1.msra.mxu0 0.0
        %409 = vmatprep.subr.mxu0 0.0
        %410 = vmatpush1.msra.mxu0 0.0
        %411 = vmatprep.subr.mxu0 0.0
        %412 = vmatpush1.msra.mxu0 0.0
        %413 = vmatprep.subr.mxu0 0.0
        %414 = vmatpush1.msra.mxu0 0.0
        %415 = vmatprep.subr.mxu0 0.0
        %416 = vmatpush1.msra.mxu0 0.0
        %417 = vmatprep.subr.mxu0 0.0
        %418 = vmatpush1.msra.mxu0 0.0
        %419 = vmatprep.subr.mxu0 0.0
        %420 = vmatpush1.msra.mxu0 0.0
        %421 = vmatprep.subr.mxu0 0.0
        %422 = vmatpush1.msra.mxu0 0.0
        %423 = vmatprep.subr.mxu0 0.0
        %424 = vmatpush1.msra.mxu0 0.0
        %425 = vmatprep.subr.mxu0 0.0
        %426 = vmatpush1.msra.mxu0 0.0
        %427 = vmatprep.subr.mxu0 0.0
        %428 = vmatpush1.msra.mxu0 0.0
        %429 = vmatprep.subr.mxu0 0.0
        %430 = vmatpush1.msra.mxu0 0.0
        %431 = vmatprep.subr.mxu0 0.0
        %432 = vmatpush1.msra.mxu0 0.0
        %433 = vmatprep.subr.mxu0 0.0
        %434 = vmatpush1.msra.mxu0 0.0
        %435 = vmatprep.subr.mxu0 0.0
        %436 = vmatpush1.msra.mxu0 0.0
        %437 = vmatprep.subr.mxu0 0.0
        %438 = vmatpush1.msra.mxu0 0.0
        %439 = vmatprep.subr.mxu0 0.0
        %440 = vmatpush1.msra.mxu0 0.0
        %441 = vmatprep.subr.mxu0 0.0
        %442 = vmatpush1.msra.mxu0 0.0
        %443 = vmatprep.subr.mxu0 0.0
        %444 = vmatpush1.msra.mxu0 0.0
        %445 = vmatprep.subr.mxu0 0.0
        %446 = vmatpush1.msra.mxu0 0.0
        %447 = vmatprep.subr.mxu0 0.0
        %448 = vmatpush1.msra.mxu0 0.0
        %449 = vmatprep.subr.mxu0 0.0
        %450 = vmatpush1.msra.mxu0 0.0
        %451 = vmatprep.subr.mxu0 0.0
        %452 = vmatpush1.msra.mxu0 0.0
        %453 = vmatprep.mubr.f32.mxu0 0.0
        %454 = vmatmul.mubr.f32.gmra.mrb[0].mxu0 %v342
        %v455 = vpop.f32.mrb[0].mxu0
        %v456 = vadd.f32 0.0, %v455
        %v457 = vpop.f32.mrb[0].mxu0
        %v458 = vadd.f32 0.0, %v457
        %459 = vmatprep.mubr.f32.mxu0 0.0
        %460 = vmatmul.mubr.f32.gmra.mrb[0].mxu0 %v345
        %v461 = vpop.f32.mrb[0].mxu0
        %v462 = vadd.f32 0.0, %v461
        %v463 = vpop.f32.mrb[0].mxu0
        %v464 = vadd.f32 0.0, %v463
        %465 = vmatprep.mubr.f32.mxu0 0.0
        %466 = vmatmul.mubr.f32.gmra.mrb[0].mxu0 %v348
        %v467 = vpop.f32.mrb[0].mxu0
        %v468 = vadd.f32 0.0, %v467
        %v469 = vpop.f32.mrb[0].mxu0
        %v470 = vadd.f32 0.0, %v469
        %471 = vmatprep.mubr.f32.mxu0 0.0
        %472 = vmatmul.mubr.f32.gmra.mrb[0].mxu0 %v351
        %v473 = vpop.f32.mrb[0].mxu0
        %v474 = vadd.f32 0.0, %v473
        %v475 = vpop.f32.mrb[0].mxu0
        %v476 = vadd.f32 0.0, %v475
        %477 = vmatprep.mubr.f32.mxu0 0.0
        %478 = vmatmul.mubr.f32.gmra.mrb[0].mxu0 %v354
        %v479 = vpop.f32.mrb[0].mxu0
        %v480 = vadd.f32 0.0, %v479
        %v481 = vpop.f32.mrb[0].mxu0
        %v482 = vadd.f32 0.0, %v481
        %483 = vmatprep.mubr.f32.mxu0 0.0
        %484 = vmatmul.mubr.f32.gmra.mrb[0].mxu0 %v357
        %v485 = vpop.f32.mrb[0].mxu0
        %v486 = vadd.f32 0.0, %v485
        %v487 = vpop.f32.mrb[0].mxu0
        %v488 = vadd.f32 0.0, %v487
        %489 = vmatprep.mubr.f32.mxu0 0.0
        %490 = vmatmul.mubr.f32.gmra.mrb[0].mxu0 %v360
        %v491 = vpop.f32.mrb[0].mxu0
        %v492 = vadd.f32 0.0, %v491
        %v493 = vpop.f32.mrb[0].mxu0
        %v494 = vadd.f32 0.0, %v493
        %495 = vmatprep.mubr.f32.mxu0 0.0
        %496 = vmatmul.mubr.f32.gmra.mrb[0].mxu0 %v363
        %v497 = vpop.f32.mrb[0].mxu0
        %v498 = vadd.f32 0.0, %v497
        %v499 = vpop.f32.mrb[0].mxu0
        %v500 = vadd.f32 0.0, %v499
        %501 = vmatprep.mubr.f32.mxu0 0.0
        %502 = vmatmul.mubr.f32.gmra.mrb[0].mxu0 %v366
        %v503 = vpop.f32.mrb[0].mxu0
        %v504 = vadd.f32 0.0, %v503
        %v505 = vpop.f32.mrb[0].mxu0
        %v506 = vadd.f32 0.0, %v505
        %507 = vmatprep.mubr.f32.mxu0 0.0
        %508 = vmatmul.mubr.f32.gmra.mrb[0].mxu0 %v369
        %v509 = vpop.f32.mrb[0].mxu0
        %v510 = vadd.f32 0.0, %v509
        %v511 = vpop.f32.mrb[0].mxu0
        %v512 = vadd.f32 0.0, %v511
        %513 = vmatprep.mubr.f32.mxu0 0.0
        %514 = vmatmul.mubr.f32.gmra.mrb[0].mxu0 %v372
        %v515 = vpop.f32.mrb[0].mxu0
        %v516 = vadd.f32 0.0, %v515
        %v517 = vpop.f32.mrb[0].mxu0
        %v518 = vadd.f32 0.0, %v517
        %519 = vmatprep.mubr.f32.mxu0 0.0
        %520 = vmatmul.mubr.f32.gmra.mrb[0].mxu0 %v375
        %v521 = vpop.f32.mrb[0].mxu0
        %v522 = vadd.f32 0.0, %v521
        %v523 = vpop.f32.mrb[0].mxu0
        %v524 = vadd.f32 0.0, %v523
        %525 = vmatprep.mubr.f32.mxu0 0.0
        %526 = vmatmul.mubr.f32.gmra.mrb[0].mxu0 %v378
        %v527 = vpop.f32.mrb[0].mxu0
        %v528 = vadd.f32 0.0, %v527
        %v529 = vpop.f32.mrb[0].mxu0
        %v530 = vadd.f32 0.0, %v529
        %531 = vmatprep.mubr.f32.mxu0 0.0
        %532 = vmatmul.mubr.f32.gmra.mrb[0].mxu0 %v381
        %v533 = vpop.f32.mrb[0].mxu0
        %v534 = vadd.f32 0.0, %v533
        %v535 = vpop.f32.mrb[0].mxu0
        %v536 = vadd.f32 0.0, %v535
        %537 = vmatprep.mubr.f32.mxu0 0.0
        %538 = vmatmul.mubr.f32.gmra.mrb[0].mxu0 %v384
        %v539 = vpop.f32.mrb[0].mxu0
        %v540 = vadd.f32 0.0, %v539
        %v541 = vpop.f32.mrb[0].mxu0
        %v542 = vadd.f32 0.0, %v541
        %543 = vmatprep.mubr.f32.mxu0 0.0
        %544 = vmatmul.mubr.f32.gmra.mrb[0].mxu0 %v387
        %v545 = vpop.f32.mrb[0].mxu0
        %v546 = vadd.f32 0.0, %v545
        %v547 = vpop.f32.mrb[0].mxu0
        %v548 = vadd.f32 0.0, %v547
        %549 = vdwg.mxu0
        %550 = vmatprep.subr.mxu0 %v311
        %551 = vmatpush1.msra.mxu0 %v310
        %552 = vmatprep.subr.mxu0 %v315
        %553 = vmatpush1.msra.mxu0 %v314
        %554 = vmatprep.subr.mxu0 %v319
        %555 = vmatpush1.msra.mxu0 %v318
        %556 = vmatprep.subr.mxu0 %v323
        %557 = vmatpush1.msra.mxu0 %v322
        %558 = vmatprep.subr.mxu0 %v327
        %559 = vmatpush1.msra.mxu0 %v326
        %560 = vmatprep.subr.mxu0 %v331
        %561 = vmatpush1.msra.mxu0 %v330
        %562 = vmatprep.subr.mxu0 %v335
        %563 = vmatpush1.msra.mxu0 %v334
        %564 = vmatprep.subr.mxu0 %v339
        %565 = vmatpush1.msra.mxu0 %v338
        %566 = vmatprep.subr.mxu0 0.0
        %567 = vmatpush1.msra.mxu0 0.0
        %568 = vmatprep.subr.mxu0 0.0
        %569 = vmatpush1.msra.mxu0 0.0
        %570 = vmatprep.subr.mxu0 0.0
        %571 = vmatpush1.msra.mxu0 0.0
        %572 = vmatprep.subr.mxu0 0.0
        %573 = vmatpush1.msra.mxu0 0.0
        %574 = vmatprep.subr.mxu0 0.0
        %575 = vmatpush1.msra.mxu0 0.0
        %576 = vmatprep.subr.mxu0 0.0
        %577 = vmatpush1.msra.mxu0 0.0
        %578 = vmatprep.subr.mxu0 0.0
        %579 = vmatpush1.msra.mxu0 0.0
        %580 = vmatprep.subr.mxu0 0.0
        %581 = vmatpush1.msra.mxu0 0.0
        %582 = vmatprep.subr.mxu0 0.0
        %583 = vmatpush1.msra.mxu0 0.0
        %584 = vmatprep.subr.mxu0 0.0
        %585 = vmatpush1.msra.mxu0 0.0
        %586 = vmatprep.subr.mxu0 0.0
        %587 = vmatpush1.msra.mxu0 0.0
        %588 = vmatprep.subr.mxu0 0.0
        %589 = vmatpush1.msra.mxu0 0.0
        %590 = vmatprep.subr.mxu0 0.0
        %591 = vmatpush1.msra.mxu0 0.0
        %592 = vmatprep.subr.mxu0 0.0
        %593 = vmatpush1.msra.mxu0 0.0
        %594 = vmatprep.subr.mxu0 0.0
        %595 = vmatpush1.msra.mxu0 0.0
        %596 = vmatprep.subr.mxu0 0.0
        %597 = vmatpush1.msra.mxu0 0.0
        %598 = vmatprep.subr.mxu0 0.0
        %599 = vmatpush1.msra.mxu0 0.0
        %600 = vmatprep.subr.mxu0 0.0
        %601 = vmatpush1.msra.mxu0 0.0
        %602 = vmatprep.subr.mxu0 0.0
        %603 = vmatpush1.msra.mxu0 0.0
        %604 = vmatprep.subr.mxu0 0.0
        %605 = vmatpush1.msra.mxu0 0.0
        %606 = vmatprep.subr.mxu0 0.0
        %607 = vmatpush1.msra.mxu0 0.0
        %608 = vmatprep.subr.mxu0 0.0
        %609 = vmatpush1.msra.mxu0 0.0
        %610 = vmatprep.subr.mxu0 0.0
        %611 = vmatpush1.msra.mxu0 0.0
        %612 = vmatprep.subr.mxu0 0.0
        %613 = vmatpush1.msra.mxu0 0.0
        %614 = vmatprep.mubr.f32.mxu0 0.0
        %615 = vmatmul.mubr.f32.gmra.mrb[0].mxu0 %v342
        %v616 = vpop.f32.mrb[0].mxu0
        %v617 = vadd.f32 0.0, %v616
        %v618 = vpop.f32.mrb[0].mxu0
        %v619 = vadd.f32 0.0, %v618
        %620 = vmatprep.mubr.f32.mxu0 0.0
        %621 = vmatmul.mubr.f32.gmra.mrb[0].mxu0 %v345
        %v622 = vpop.f32.mrb[0].mxu0
        %v623 = vadd.f32 0.0, %v622
        %v624 = vpop.f32.mrb[0].mxu0
        %v625 = vadd.f32 0.0, %v624
        %626 = vmatprep.mubr.f32.mxu0 0.0
        %627 = vmatmul.mubr.f32.gmra.mrb[0].mxu0 %v348
        %v628 = vpop.f32.mrb[0].mxu0
        %v629 = vadd.f32 0.0, %v628
        %v630 = vpop.f32.mrb[0].mxu0
        %v631 = vadd.f32 0.0, %v630
        %632 = vmatprep.mubr.f32.mxu0 0.0
        %633 = vmatmul.mubr.f32.gmra.mrb[0].mxu0 %v351
        %v634 = vpop.f32.mrb[0].mxu0
        %v635 = vadd.f32 0.0, %v634
        %v636 = vpop.f32.mrb[0].mxu0
        %v637 = vadd.f32 0.0, %v636
        %638 = vmatprep.mubr.f32.mxu0 0.0
        %639 = vmatmul.mubr.f32.gmra.mrb[0].mxu0 %v354
        %v640 = vpop.f32.mrb[0].mxu0
        %v641 = vadd.f32 0.0, %v640
        %v642 = vpop.f32.mrb[0].mxu0
        %v643 = vadd.f32 0.0, %v642
        %644 = vmatprep.mubr.f32.mxu0 0.0
        %645 = vmatmul.mubr.f32.gmra.mrb[0].mxu0 %v357
        %v646 = vpop.f32.mrb[0].mxu0
        %v647 = vadd.f32 0.0, %v646
        %v648 = vpop.f32.mrb[0].mxu0
        %v649 = vadd.f32 0.0, %v648
        %650 = vmatprep.mubr.f32.mxu0 0.0
        %651 = vmatmul.mubr.f32.gmra.mrb[0].mxu0 %v360
        %v652 = vpop.f32.mrb[0].mxu0
        %v653 = vadd.f32 0.0, %v652
        %v654 = vpop.f32.mrb[0].mxu0
        %v655 = vadd.f32 0.0, %v654
        %656 = vmatprep.mubr.f32.mxu0 0.0
        %657 = vmatmul.mubr.f32.gmra.mrb[0].mxu0 %v363
        %v658 = vpop.f32.mrb[0].mxu0
        %v659 = vadd.f32 0.0, %v658
        %v660 = vpop.f32.mrb[0].mxu0
        %v661 = vadd.f32 0.0, %v660
        %662 = vmatprep.mubr.f32.mxu0 0.0
        %663 = vmatmul.mubr.f32.gmra.mrb[0].mxu0 %v366
        %v664 = vpop.f32.mrb[0].mxu0
        %v665 = vadd.f32 0.0, %v664
        %v666 = vpop.f32.mrb[0].mxu0
        %v667 = vadd.f32 0.0, %v666
        %668 = vmatprep.mubr.f32.mxu0 0.0
        %669 = vmatmul.mubr.f32.gmra.mrb[0].mxu0 %v369
        %v670 = vpop.f32.mrb[0].mxu0
        %v671 = vadd.f32 0.0, %v670
        %v672 = vpop.f32.mrb[0].mxu0
        %v673 = vadd.f32 0.0, %v672
        %674 = vmatprep.mubr.f32.mxu0 0.0
        %675 = vmatmul.mubr.f32.gmra.mrb[0].mxu0 %v372
        %v676 = vpop.f32.mrb[0].mxu0
        %v677 = vadd.f32 0.0, %v676
        %v678 = vpop.f32.mrb[0].mxu0
        %v679 = vadd.f32 0.0, %v678
        %680 = vmatprep.mubr.f32.mxu0 0.0
        %681 = vmatmul.mubr.f32.gmra.mrb[0].mxu0 %v375
        %v682 = vpop.f32.mrb[0].mxu0
        %v683 = vadd.f32 0.0, %v682
        %v684 = vpop.f32.mrb[0].mxu0
        %v685 = vadd.f32 0.0, %v684
        %686 = vmatprep.mubr.f32.mxu0 0.0
        %687 = vmatmul.mubr.f32.gmra.mrb[0].mxu0 %v378
        %v688 = vpop.f32.mrb[0].mxu0
        %v689 = vadd.f32 0.0, %v688
        %v690 = vpop.f32.mrb[0].mxu0
        %v691 = vadd.f32 0.0, %v690
        %692 = vmatprep.mubr.f32.mxu0 0.0
        %693 = vmatmul.mubr.f32.gmra.mrb[0].mxu0 %v381
        %v694 = vpop.f32.mrb[0].mxu0
        %v695 = vadd.f32 0.0, %v694
        %v696 = vpop.f32.mrb[0].mxu0
        %v697 = vadd.f32 0.0, %v696
        %698 = vmatprep.mubr.f32.mxu0 0.0
        %699 = vmatmul.mubr.f32.gmra.mrb[0].mxu0 %v384
        %v700 = vpop.f32.mrb[0].mxu0
        %v701 = vadd.f32 0.0, %v700
        %v702 = vpop.f32.mrb[0].mxu0
        %v703 = vadd.f32 0.0, %v702
        %704 = vmatprep.mubr.f32.mxu0 0.0
        %705 = vmatmul.mubr.f32.gmra.mrb[0].mxu0 %v387
        %v706 = vpop.f32.mrb[0].mxu0
        %v707 = vadd.f32 0.0, %v706
        %v708 = vpop.f32.mrb[0].mxu0
        %v709 = vadd.f32 0.0, %v708
        %710 = vdwg.mxu0
        %v712 = vsel %vm340, %v244, 0
        %v715 = vsel %vm340, %v245, 0
        %v718 = vsel %vm340, %v246, 0
        %v721 = vsel %vm340, %v247, 0
        %v724 = vsel %vm340, %v248, 0
        %v727 = vsel %vm340, %v249, 0
        %v730 = vsel %vm340, %v250, 0
        %v733 = vsel %vm340, %v251, 0
        %v736 = vsel %vm340, %v252, 0
        %v739 = vsel %vm340, %v253, 0
        %v742 = vsel %vm340, %v254, 0
        %v745 = vsel %vm340, %v255, 0
        %v748 = vsel %vm340, %v256, 0
        %v751 = vsel %vm340, %v257, 0
        %v754 = vsel %vm340, %v258, 0
        %v757 = vsel %vm340, %v259, 0
        %759 = vmatprep.subr.mxu0 %v261
        %760 = vmatpush1.msra.mxu0 %v260
        %761 = vmatprep.subr.mxu0 %v265
        %762 = vmatpush1.msra.mxu0 %v264
        %763 = vmatprep.subr.mxu0 %v269
        %764 = vmatpush1.msra.mxu0 %v268
        %765 = vmatprep.subr.mxu0 %v273
        %766 = vmatpush1.msra.mxu0 %v272
        %767 = vmatprep.subr.mxu0 %v277
        %768 = vmatpush1.msra.mxu0 %v276
        %769 = vmatprep.subr.mxu0 %v281
        %770 = vmatpush1.msra.mxu0 %v280
        %771 = vmatprep.subr.mxu0 %v285
        %772 = vmatpush1.msra.mxu0 %v284
        %773 = vmatprep.subr.mxu0 %v289
        %774 = vmatpush1.msra.mxu0 %v288
        %775 = vmatprep.subr.mxu0 0.0
        %776 = vmatpush1.msra.mxu0 0.0
        %777 = vmatprep.subr.mxu0 0.0
        %778 = vmatpush1.msra.mxu0 0.0
        %779 = vmatprep.subr.mxu0 0.0
        %780 = vmatpush1.msra.mxu0 0.0
        %781 = vmatprep.subr.mxu0 0.0
        %782 = vmatpush1.msra.mxu0 0.0
        %783 = vmatprep.subr.mxu0 0.0
        %784 = vmatpush1.msra.mxu0 0.0
        %785 = vmatprep.subr.mxu0 0.0
        %786 = vmatpush1.msra.mxu0 0.0
        %787 = vmatprep.subr.mxu0 0.0
        %788 = vmatpush1.msra.mxu0 0.0
        %789 = vmatprep.subr.mxu0 0.0
        %790 = vmatpush1.msra.mxu0 0.0
        %791 = vmatprep.subr.mxu0 0.0
        %792 = vmatpush1.msra.mxu0 0.0
        %793 = vmatprep.subr.mxu0 0.0
        %794 = vmatpush1.msra.mxu0 0.0
        %795 = vmatprep.subr.mxu0 0.0
        %796 = vmatpush1.msra.mxu0 0.0
        %797 = vmatprep.subr.mxu0 0.0
        %798 = vmatpush1.msra.mxu0 0.0
        %799 = vmatprep.subr.mxu0 0.0
        %800 = vmatpush1.msra.mxu0 0.0
        %801 = vmatprep.subr.mxu0 0.0
        %802 = vmatpush1.msra.mxu0 0.0
        %803 = vmatprep.subr.mxu0 0.0
        %804 = vmatpush1.msra.mxu0 0.0
        %805 = vmatprep.subr.mxu0 0.0
        %806 = vmatpush1.msra.mxu0 0.0
        %807 = vmatprep.subr.mxu0 0.0
        %808 = vmatpush1.msra.mxu0 0.0
        %809 = vmatprep.subr.mxu0 0.0
        %810 = vmatpush1.msra.mxu0 0.0
        %811 = vmatprep.subr.mxu0 0.0
        %812 = vmatpush1.msra.mxu0 0.0
        %813 = vmatprep.subr.mxu0 0.0
        %814 = vmatpush1.msra.mxu0 0.0
        %815 = vmatprep.subr.mxu0 0.0
        %816 = vmatpush1.msra.mxu0 0.0
        %817 = vmatprep.subr.mxu0 0.0
        %818 = vmatpush1.msra.mxu0 0.0
        %819 = vmatprep.subr.mxu0 0.0
        %820 = vmatpush1.msra.mxu0 0.0
        %821 = vmatprep.subr.mxu0 0.0
        %822 = vmatpush1.msra.mxu0 0.0
        %823 = vmatprep.mubr.f32.mxu0 0.0
        %824 = vmatmul.mubr.f32.gmra.mrb[0].mxu0 %v712
        %v825 = vpop.f32.mrb[0].mxu0
        %v826 = vadd.f32 %v456, %v825
        %v827 = vpop.f32.mrb[0].mxu0
        %v828 = vadd.f32 %v458, %v827
        %829 = vmatprep.mubr.f32.mxu0 0.0
        %830 = vmatmul.mubr.f32.gmra.mrb[0].mxu0 %v715
        %v831 = vpop.f32.mrb[0].mxu0
        %v832 = vadd.f32 %v462, %v831
        %v833 = vpop.f32.mrb[0].mxu0
        %v834 = vadd.f32 %v464, %v833
        %835 = vmatprep.mubr.f32.mxu0 0.0
        %836 = vmatmul.mubr.f32.gmra.mrb[0].mxu0 %v718
        %v837 = vpop.f32.mrb[0].mxu0
        %v838 = vadd.f32 %v468, %v837
        %v839 = vpop.f32.mrb[0].mxu0
        %v840 = vadd.f32 %v470, %v839
        %841 = vmatprep.mubr.f32.mxu0 0.0
        %842 = vmatmul.mubr.f32.gmra.mrb[0].mxu0 %v721
        %v843 = vpop.f32.mrb[0].mxu0
        %v844 = vadd.f32 %v474, %v843
        %v845 = vpop.f32.mrb[0].mxu0
        %v846 = vadd.f32 %v476, %v845
        %847 = vmatprep.mubr.f32.mxu0 0.0
        %848 = vmatmul.mubr.f32.gmra.mrb[0].mxu0 %v724
        %v849 = vpop.f32.mrb[0].mxu0
        %v850 = vadd.f32 %v480, %v849
        %v851 = vpop.f32.mrb[0].mxu0
        %v852 = vadd.f32 %v482, %v851
        %853 = vmatprep.mubr.f32.mxu0 0.0
        %854 = vmatmul.mubr.f32.gmra.mrb[0].mxu0 %v727
        %v855 = vpop.f32.mrb[0].mxu0
        %v856 = vadd.f32 %v486, %v855
        %v857 = vpop.f32.mrb[0].mxu0
        %v858 = vadd.f32 %v488, %v857
        %859 = vmatprep.mubr.f32.mxu0 0.0
        %860 = vmatmul.mubr.f32.gmra.mrb[0].mxu0 %v730
        %v861 = vpop.f32.mrb[0].mxu0
        %v862 = vadd.f32 %v492, %v861
        %v863 = vpop.f32.mrb[0].mxu0
        %v864 = vadd.f32 %v494, %v863
        %865 = vmatprep.mubr.f32.mxu0 0.0
        %866 = vmatmul.mubr.f32.gmra.mrb[0].mxu0 %v733
        %v867 = vpop.f32.mrb[0].mxu0
        %v868 = vadd.f32 %v498, %v867
        %v869 = vpop.f32.mrb[0].mxu0
        %v870 = vadd.f32 %v500, %v869
        %871 = vmatprep.mubr.f32.mxu0 0.0
        %872 = vmatmul.mubr.f32.gmra.mrb[0].mxu0 %v736
        %v873 = vpop.f32.mrb[0].mxu0
        %v874 = vadd.f32 %v504, %v873
        %v875 = vpop.f32.mrb[0].mxu0
        %v876 = vadd.f32 %v506, %v875
        %877 = vmatprep.mubr.f32.mxu0 0.0
        %878 = vmatmul.mubr.f32.gmra.mrb[0].mxu0 %v739
        %v879 = vpop.f32.mrb[0].mxu0
        %v880 = vadd.f32 %v510, %v879
        %v881 = vpop.f32.mrb[0].mxu0
        %v882 = vadd.f32 %v512, %v881
        %883 = vmatprep.mubr.f32.mxu0 0.0
        %884 = vmatmul.mubr.f32.gmra.mrb[0].mxu0 %v742
        %v885 = vpop.f32.mrb[0].mxu0
        %v886 = vadd.f32 %v516, %v885
        %v887 = vpop.f32.mrb[0].mxu0
        %v888 = vadd.f32 %v518, %v887
        %889 = vmatprep.mubr.f32.mxu0 0.0
        %890 = vmatmul.mubr.f32.gmra.mrb[0].mxu0 %v745
        %v891 = vpop.f32.mrb[0].mxu0
        %v892 = vadd.f32 %v522, %v891
        %v893 = vpop.f32.mrb[0].mxu0
        %v894 = vadd.f32 %v524, %v893
        %895 = vmatprep.mubr.f32.mxu0 0.0
        %896 = vmatmul.mubr.f32.gmra.mrb[0].mxu0 %v748
        %v897 = vpop.f32.mrb[0].mxu0
        %v898 = vadd.f32 %v528, %v897
        %v899 = vpop.f32.mrb[0].mxu0
        %v900 = vadd.f32 %v530, %v899
        %901 = vmatprep.mubr.f32.mxu0 0.0
        %902 = vmatmul.mubr.f32.gmra.mrb[0].mxu0 %v751
        %v903 = vpop.f32.mrb[0].mxu0
        %v904 = vadd.f32 %v534, %v903
        %v905 = vpop.f32.mrb[0].mxu0
        %v906 = vadd.f32 %v536, %v905
        %907 = vmatprep.mubr.f32.mxu0 0.0
        %908 = vmatmul.mubr.f32.gmra.mrb[0].mxu0 %v754
        %v909 = vpop.f32.mrb[0].mxu0
        %v910 = vadd.f32 %v540, %v909
        %v911 = vpop.f32.mrb[0].mxu0
        %v912 = vadd.f32 %v542, %v911
        %913 = vmatprep.mubr.f32.mxu0 0.0
        %914 = vmatmul.mubr.f32.gmra.mrb[0].mxu0 %v757
        %v915 = vpop.f32.mrb[0].mxu0
        %v916 = vadd.f32 %v546, %v915
        %v917 = vpop.f32.mrb[0].mxu0
        %v918 = vadd.f32 %v548, %v917
        %919 = vdwg.mxu0
        %920 = vmatprep.subr.mxu0 %v263
        %921 = vmatpush1.msra.mxu0 %v262
        %922 = vmatprep.subr.mxu0 %v267
        %923 = vmatpush1.msra.mxu0 %v266
        %924 = vmatprep.subr.mxu0 %v271
        %925 = vmatpush1.msra.mxu0 %v270
        %926 = vmatprep.subr.mxu0 %v275
        %927 = vmatpush1.msra.mxu0 %v274
        %928 = vmatprep.subr.mxu0 %v279
        %929 = vmatpush1.msra.mxu0 %v278
        %930 = vmatprep.subr.mxu0 %v283
        %931 = vmatpush1.msra.mxu0 %v282
        %932 = vmatprep.subr.mxu0 %v287
        %933 = vmatpush1.msra.mxu0 %v286
        %934 = vmatprep.subr.mxu0 %v291
        %935 = vmatpush1.msra.mxu0 %v290
        %936 = vmatprep.subr.mxu0 0.0
        %937 = vmatpush1.msra.mxu0 0.0
        %938 = vmatprep.subr.mxu0 0.0
        %939 = vmatpush1.msra.mxu0 0.0
        %940 = vmatprep.subr.mxu0 0.0
        %941 = vmatpush1.msra.mxu0 0.0
        %942 = vmatprep.subr.mxu0 0.0
        %943 = vmatpush1.msra.mxu0 0.0
        %944 = vmatprep.subr.mxu0 0.0
        %945 = vmatpush1.msra.mxu0 0.0
        %946 = vmatprep.subr.mxu0 0.0
        %947 = vmatpush1.msra.mxu0 0.0
        %948 = vmatprep.subr.mxu0 0.0
        %949 = vmatpush1.msra.mxu0 0.0
        %950 = vmatprep.subr.mxu0 0.0
        %951 = vmatpush1.msra.mxu0 0.0
        %952 = vmatprep.subr.mxu0 0.0
        %953 = vmatpush1.msra.mxu0 0.0
        %954 = vmatprep.subr.mxu0 0.0
        %955 = vmatpush1.msra.mxu0 0.0
        %956 = vmatprep.subr.mxu0 0.0
        %957 = vmatpush1.msra.mxu0 0.0
        %958 = vmatprep.subr.mxu0 0.0
        %959 = vmatpush1.msra.mxu0 0.0
        %960 = vmatprep.subr.mxu0 0.0
        %961 = vmatpush1.msra.mxu0 0.0
        %962 = vmatprep.subr.mxu0 0.0
        %963 = vmatpush1.msra.mxu0 0.0
        %964 = vmatprep.subr.mxu0 0.0
        %965 = vmatpush1.msra.mxu0 0.0
        %966 = vmatprep.subr.mxu0 0.0
        %967 = vmatpush1.msra.mxu0 0.0
        %968 = vmatprep.subr.mxu0 0.0
        %969 = vmatpush1.msra.mxu0 0.0
        %970 = vmatprep.subr.mxu0 0.0
        %971 = vmatpush1.msra.mxu0 0.0
        %972 = vmatprep.subr.mxu0 0.0
        %973 = vmatpush1.msra.mxu0 0.0
        %974 = vmatprep.subr.mxu0 0.0
        %975 = vmatpush1.msra.mxu0 0.0
        %976 = vmatprep.subr.mxu0 0.0
        %977 = vmatpush1.msra.mxu0 0.0
        %978 = vmatprep.subr.mxu0 0.0
        %979 = vmatpush1.msra.mxu0 0.0
        %980 = vmatprep.subr.mxu0 0.0
        %981 = vmatpush1.msra.mxu0 0.0
        %982 = vmatprep.subr.mxu0 0.0
        %983 = vmatpush1.msra.mxu0 0.0
        %984 = vmatprep.mubr.f32.mxu0 0.0
        %985 = vmatmul.mubr.f32.gmra.mrb[0].mxu0 %v712
        %v986 = vpop.f32.mrb[0].mxu0
        %v987 = vadd.f32 %v617, %v986
        %v988 = vpop.f32.mrb[0].mxu0
        %v989 = vadd.f32 %v619, %v988
        %990 = vmatprep.mubr.f32.mxu0 0.0
        %991 = vmatmul.mubr.f32.gmra.mrb[0].mxu0 %v715
        %v992 = vpop.f32.mrb[0].mxu0
        %v993 = vadd.f32 %v623, %v992
        %v994 = vpop.f32.mrb[0].mxu0
        %v995 = vadd.f32 %v625, %v994
        %996 = vmatprep.mubr.f32.mxu0 0.0
        %997 = vmatmul.mubr.f32.gmra.mrb[0].mxu0 %v718
        %v998 = vpop.f32.mrb[0].mxu0
        %v999 = vadd.f32 %v629, %v998
        %v1000 = vpop.f32.mrb[0].mxu0
        %v1001 = vadd.f32 %v631, %v1000
        %1002 = vmatprep.mubr.f32.mxu0 0.0
        %1003 = vmatmul.mubr.f32.gmra.mrb[0].mxu0 %v721
        %v1004 = vpop.f32.mrb[0].mxu0
        %v1005 = vadd.f32 %v635, %v1004
        %v1006 = vpop.f32.mrb[0].mxu0
        %v1007 = vadd.f32 %v637, %v1006
        %1008 = vmatprep.mubr.f32.mxu0 0.0
        %1009 = vmatmul.mubr.f32.gmra.mrb[0].mxu0 %v724
        %v1010 = vpop.f32.mrb[0].mxu0
        %v1011 = vadd.f32 %v641, %v1010
        %v1012 = vpop.f32.mrb[0].mxu0
        %v1013 = vadd.f32 %v643, %v1012
        %1014 = vmatprep.mubr.f32.mxu0 0.0
        %1015 = vmatmul.mubr.f32.gmra.mrb[0].mxu0 %v727
        %v1016 = vpop.f32.mrb[0].mxu0
        %v1017 = vadd.f32 %v647, %v1016
        %v1018 = vpop.f32.mrb[0].mxu0
        %v1019 = vadd.f32 %v649, %v1018
        %1020 = vmatprep.mubr.f32.mxu0 0.0
        %1021 = vmatmul.mubr.f32.gmra.mrb[0].mxu0 %v730
        %v1022 = vpop.f32.mrb[0].mxu0
        %v1023 = vadd.f32 %v653, %v1022
        %v1024 = vpop.f32.mrb[0].mxu0
        %v1025 = vadd.f32 %v655, %v1024
        %1026 = vmatprep.mubr.f32.mxu0 0.0
        %1027 = vmatmul.mubr.f32.gmra.mrb[0].mxu0 %v733
        %v1028 = vpop.f32.mrb[0].mxu0
        %v1029 = vadd.f32 %v659, %v1028
        %v1030 = vpop.f32.mrb[0].mxu0
        %v1031 = vadd.f32 %v661, %v1030
        %1032 = vmatprep.mubr.f32.mxu0 0.0
        %1033 = vmatmul.mubr.f32.gmra.mrb[0].mxu0 %v736
        %v1034 = vpop.f32.mrb[0].mxu0
        %v1035 = vadd.f32 %v665, %v1034
        %v1036 = vpop.f32.mrb[0].mxu0
        %v1037 = vadd.f32 %v667, %v1036
        %1038 = vmatprep.mubr.f32.mxu0 0.0
        %1039 = vmatmul.mubr.f32.gmra.mrb[0].mxu0 %v739
        %v1040 = vpop.f32.mrb[0].mxu0
        %v1041 = vadd.f32 %v671, %v1040
        %v1042 = vpop.f32.mrb[0].mxu0
        %v1043 = vadd.f32 %v673, %v1042
        %1044 = vmatprep.mubr.f32.mxu0 0.0
        %1045 = vmatmul.mubr.f32.gmra.mrb[0].mxu0 %v742
        %v1046 = vpop.f32.mrb[0].mxu0
        %v1047 = vadd.f32 %v677, %v1046
        %v1048 = vpop.f32.mrb[0].mxu0
        %v1049 = vadd.f32 %v679, %v1048
        %1050 = vmatprep.mubr.f32.mxu0 0.0
        %1051 = vmatmul.mubr.f32.gmra.mrb[0].mxu0 %v745
        %v1052 = vpop.f32.mrb[0].mxu0
        %v1053 = vadd.f32 %v683, %v1052
        %v1054 = vpop.f32.mrb[0].mxu0
        %v1055 = vadd.f32 %v685, %v1054
        %1056 = vmatprep.mubr.f32.mxu0 0.0
        %1057 = vmatmul.mubr.f32.gmra.mrb[0].mxu0 %v748
        %v1058 = vpop.f32.mrb[0].mxu0
        %v1059 = vadd.f32 %v689, %v1058
        %v1060 = vpop.f32.mrb[0].mxu0
        %v1061 = vadd.f32 %v691, %v1060
        %1062 = vmatprep.mubr.f32.mxu0 0.0
        %1063 = vmatmul.mubr.f32.gmra.mrb[0].mxu0 %v751
        %v1064 = vpop.f32.mrb[0].mxu0
        %v1065 = vadd.f32 %v695, %v1064
        %v1066 = vpop.f32.mrb[0].mxu0
        %v1067 = vadd.f32 %v697, %v1066
        %1068 = vmatprep.mubr.f32.mxu0 0.0
        %1069 = vmatmul.mubr.f32.gmra.mrb[0].mxu0 %v754
        %v1070 = vpop.f32.mrb[0].mxu0
        %v1071 = vadd.f32 %v701, %v1070
        %v1072 = vpop.f32.mrb[0].mxu0
        %v1073 = vadd.f32 %v703, %v1072
        %1074 = vmatprep.mubr.f32.mxu0 0.0
        %1075 = vmatmul.mubr.f32.gmra.mrb[0].mxu0 %v757
        %v1076 = vpop.f32.mrb[0].mxu0
        %v1077 = vadd.f32 %v707, %v1076
        %v1078 = vpop.f32.mrb[0].mxu0
        %v1079 = vadd.f32 %v709, %v1078
        %1080 = vdwg.mxu0
        %v1081 = vld [vmem:[#allocation2 + $0x2] sm:$0xff]
        %v1082 = vld [vmem:[#allocation2 + $0xa] sm:$0xff]
        %v1083 = vld [vmem:[#allocation2 + $0x12] sm:$0xff]
        %v1084 = vld [vmem:[#allocation2 + $0x1a] sm:$0xff]
        %v1085 = vld [vmem:[#allocation2 + $0x22] sm:$0xff]
        %v1086 = vld [vmem:[#allocation2 + $0x2a] sm:$0xff]
        %v1087 = vld [vmem:[#allocation2 + $0x32] sm:$0xff]
        %v1088 = vld [vmem:[#allocation2 + $0x3a] sm:$0xff]
        %v1089 = vld [vmem:[#allocation2 + $0x42] sm:$0xff]
        %v1090 = vld [vmem:[#allocation2 + $0x4a] sm:$0xff]
        %v1091 = vld [vmem:[#allocation2 + $0x52] sm:$0xff]
        %v1092 = vld [vmem:[#allocation2 + $0x5a] sm:$0xff]
        %v1093 = vld [vmem:[#allocation2 + $0x62] sm:$0xff]
        %v1094 = vld [vmem:[#allocation2 + $0x6a] sm:$0xff]
        %v1095 = vld [vmem:[#allocation2 + $0x72] sm:$0xff]
        %v1096 = vld [vmem:[#allocation2 + $0x7a] sm:$0xff]
        %v1097 = vld [vmem:[#allocation4 + $0x200] sm:$0xff]
        %v1098 = vld [vmem:[#allocation4 + $0x208] sm:$0xff]
        %v1099 = vld [vmem:[#allocation4 + $0x210] sm:$0xff]
        %v1100 = vld [vmem:[#allocation4 + $0x218] sm:$0xff]
        %v1101 = vld [vmem:[#allocation4 + $0x220] sm:$0xff]
        %v1102 = vld [vmem:[#allocation4 + $0x228] sm:$0xff]
        %v1103 = vld [vmem:[#allocation4 + $0x230] sm:$0xff]
        %v1104 = vld [vmem:[#allocation4 + $0x238] sm:$0xff]
        %v1105 = vld [vmem:[#allocation4 + $0x240] sm:$0xff]
        %v1106 = vld [vmem:[#allocation4 + $0x248] sm:$0xff]
        %v1107 = vld [vmem:[#allocation4 + $0x250] sm:$0xff]
        %v1108 = vld [vmem:[#allocation4 + $0x258] sm:$0xff]
        %v1109 = vld [vmem:[#allocation4 + $0x260] sm:$0xff]
        %v1110 = vld [vmem:[#allocation4 + $0x268] sm:$0xff]
        %v1111 = vld [vmem:[#allocation4 + $0x270] sm:$0xff]
        %v1112 = vld [vmem:[#allocation4 + $0x278] sm:$0xff]
        %v1113 = vld [vmem:[#allocation4 + $0x280] sm:$0xff]
        %v1114 = vld [vmem:[#allocation4 + $0x288] sm:$0xff]
        %v1115 = vld [vmem:[#allocation4 + $0x290] sm:$0xff]
        %v1116 = vld [vmem:[#allocation4 + $0x298] sm:$0xff]
        %v1117 = vld [vmem:[#allocation4 + $0x2a0] sm:$0xff]
        %v1118 = vld [vmem:[#allocation4 + $0x2a8] sm:$0xff]
        %v1119 = vld [vmem:[#allocation4 + $0x2b0] sm:$0xff]
        %v1120 = vld [vmem:[#allocation4 + $0x2b8] sm:$0xff]
        %v1121 = vld [vmem:[#allocation4 + $0x2c0] sm:$0xff]
        %v1122 = vld [vmem:[#allocation4 + $0x2c8] sm:$0xff]
        %v1123 = vld [vmem:[#allocation4 + $0x2d0] sm:$0xff]
        %v1124 = vld [vmem:[#allocation4 + $0x2d8] sm:$0xff]
        %v1125 = vld [vmem:[#allocation4 + $0x2e0] sm:$0xff]
        %v1126 = vld [vmem:[#allocation4 + $0x2e8] sm:$0xff]
        %v1127 = vld [vmem:[#allocation4 + $0x2f0] sm:$0xff]
        %v1128 = vld [vmem:[#allocation4 + $0x2f8] sm:$0xff]
        %v1130 = vsel %vm340, %v1081, 0
        %v1133 = vsel %vm340, %v1082, 0
        %v1136 = vsel %vm340, %v1083, 0
        %v1139 = vsel %vm340, %v1084, 0
        %v1142 = vsel %vm340, %v1085, 0
        %v1145 = vsel %vm340, %v1086, 0
        %v1148 = vsel %vm340, %v1087, 0
        %v1151 = vsel %vm340, %v1088, 0
        %v1154 = vsel %vm340, %v1089, 0
        %v1157 = vsel %vm340, %v1090, 0
        %v1160 = vsel %vm340, %v1091, 0
        %v1163 = vsel %vm340, %v1092, 0
        %v1166 = vsel %vm340, %v1093, 0
        %v1169 = vsel %vm340, %v1094, 0
        %v1172 = vsel %vm340, %v1095, 0
        %v1175 = vsel %vm340, %v1096, 0
        %1177 = vmatprep.subr.mxu0 %v1098
        %1178 = vmatpush1.msra.mxu0 %v1097
        %1179 = vmatprep.subr.mxu0 %v1102
        %1180 = vmatpush1.msra.mxu0 %v1101
        %1181 = vmatprep.subr.mxu0 %v1106
        %1182 = vmatpush1.msra.mxu0 %v1105
        %1183 = vmatprep.subr.mxu0 %v1110
        %1184 = vmatpush1.msra.mxu0 %v1109
        %1185 = vmatprep.subr.mxu0 %v1114
        %1186 = vmatpush1.msra.mxu0 %v1113
        %1187 = vmatprep.subr.mxu0 %v1118
        %1188 = vmatpush1.msra.mxu0 %v1117
        %1189 = vmatprep.subr.mxu0 %v1122
        %1190 = vmatpush1.msra.mxu0 %v1121
        %1191 = vmatprep.subr.mxu0 %v1126
        %1192 = vmatpush1.msra.mxu0 %v1125
        %1193 = vmatprep.subr.mxu0 0.0
        %1194 = vmatpush1.msra.mxu0 0.0
        %1195 = vmatprep.subr.mxu0 0.0
        %1196 = vmatpush1.msra.mxu0 0.0
        %1197 = vmatprep.subr.mxu0 0.0
        %1198 = vmatpush1.msra.mxu0 0.0
        %1199 = vmatprep.subr.mxu0 0.0
        %1200 = vmatpush1.msra.mxu0 0.0
        %1201 = vmatprep.subr.mxu0 0.0
        %1202 = vmatpush1.msra.mxu0 0.0
        %1203 = vmatprep.subr.mxu0 0.0
        %1204 = vmatpush1.msra.mxu0 0.0
        %1205 = vmatprep.subr.mxu0 0.0
        %1206 = vmatpush1.msra.mxu0 0.0
        %1207 = vmatprep.subr.mxu0 0.0
        %1208 = vmatpush1.msra.mxu0 0.0
        %1209 = vmatprep.subr.mxu0 0.0
        %1210 = vmatpush1.msra.mxu0 0.0
        %1211 = vmatprep.subr.mxu0 0.0
        %1212 = vmatpush1.msra.mxu0 0.0
        %1213 = vmatprep.subr.mxu0 0.0
        %1214 = vmatpush1.msra.mxu0 0.0
        %1215 = vmatprep.subr.mxu0 0.0
        %1216 = vmatpush1.msra.mxu0 0.0
        %1217 = vmatprep.subr.mxu0 0.0
        %1218 = vmatpush1.msra.mxu0 0.0
        %1219 = vmatprep.subr.mxu0 0.0
        %1220 = vmatpush1.msra.mxu0 0.0
        %1221 = vmatprep.subr.mxu0 0.0
        %1222 = vmatpush1.msra.mxu0 0.0
        %1223 = vmatprep.subr.mxu0 0.0
        %1224 = vmatpush1.msra.mxu0 0.0
        %1225 = vmatprep.subr.mxu0 0.0
        %1226 = vmatpush1.msra.mxu0 0.0
        %1227 = vmatprep.subr.mxu0 0.0
        %1228 = vmatpush1.msra.mxu0 0.0
        %1229 = vmatprep.subr.mxu0 0.0
        %1230 = vmatpush1.msra.mxu0 0.0
        %1231 = vmatprep.subr.mxu0 0.0
        %1232 = vmatpush1.msra.mxu0 0.0
        %1233 = vmatprep.subr.mxu0 0.0
        %1234 = vmatpush1.msra.mxu0 0.0
        %1235 = vmatprep.subr.mxu0 0.0
        %1236 = vmatpush1.msra.mxu0 0.0
        %1237 = vmatprep.subr.mxu0 0.0
        %1238 = vmatpush1.msra.mxu0 0.0
        %1239 = vmatprep.subr.mxu0 0.0
        %1240 = vmatpush1.msra.mxu0 0.0
        %1241 = vmatprep.mubr.f32.mxu0 0.0
        %1242 = vmatmul.mubr.f32.gmra.mrb[0].mxu0 %v1130
        %v1243 = vpop.f32.mrb[0].mxu0
        %v1244 = vadd.f32 0.0, %v1243
        %v1245 = vpop.f32.mrb[0].mxu0
        %v1246 = vadd.f32 0.0, %v1245
        %1247 = vmatprep.mubr.f32.mxu0 0.0
        %1248 = vmatmul.mubr.f32.gmra.mrb[0].mxu0 %v1133
        %v1249 = vpop.f32.mrb[0].mxu0
        %v1250 = vadd.f32 0.0, %v1249
        %v1251 = vpop.f32.mrb[0].mxu0
        %v1252 = vadd.f32 0.0, %v1251
        %1253 = vmatprep.mubr.f32.mxu0 0.0
        %1254 = vmatmul.mubr.f32.gmra.mrb[0].mxu0 %v1136
        %v1255 = vpop.f32.mrb[0].mxu0
        %v1256 = vadd.f32 0.0, %v1255
        %v1257 = vpop.f32.mrb[0].mxu0
        %v1258 = vadd.f32 0.0, %v1257
        %1259 = vmatprep.mubr.f32.mxu0 0.0
        %1260 = vmatmul.mubr.f32.gmra.mrb[0].mxu0 %v1139
        %v1261 = vpop.f32.mrb[0].mxu0
        %v1262 = vadd.f32 0.0, %v1261
        %v1263 = vpop.f32.mrb[0].mxu0
        %v1264 = vadd.f32 0.0, %v1263
        %1265 = vmatprep.mubr.f32.mxu0 0.0
        %1266 = vmatmul.mubr.f32.gmra.mrb[0].mxu0 %v1142
        %v1267 = vpop.f32.mrb[0].mxu0
        %v1268 = vadd.f32 0.0, %v1267
        %v1269 = vpop.f32.mrb[0].mxu0
        %v1270 = vadd.f32 0.0, %v1269
        %1271 = vmatprep.mubr.f32.mxu0 0.0
        %1272 = vmatmul.mubr.f32.gmra.mrb[0].mxu0 %v1145
        %v1273 = vpop.f32.mrb[0].mxu0
        %v1274 = vadd.f32 0.0, %v1273
        %v1275 = vpop.f32.mrb[0].mxu0
        %v1276 = vadd.f32 0.0, %v1275
        %1277 = vmatprep.mubr.f32.mxu0 0.0
        %1278 = vmatmul.mubr.f32.gmra.mrb[0].mxu0 %v1148
        %v1279 = vpop.f32.mrb[0].mxu0
        %v1280 = vadd.f32 0.0, %v1279
        %v1281 = vpop.f32.mrb[0].mxu0
        %v1282 = vadd.f32 0.0, %v1281
        %1283 = vmatprep.mubr.f32.mxu0 0.0
        %1284 = vmatmul.mubr.f32.gmra.mrb[0].mxu0 %v1151
        %v1285 = vpop.f32.mrb[0].mxu0
        %v1286 = vadd.f32 0.0, %v1285
        %v1287 = vpop.f32.mrb[0].mxu0
        %v1288 = vadd.f32 0.0, %v1287
        %1289 = vmatprep.mubr.f32.mxu0 0.0
        %1290 = vmatmul.mubr.f32.gmra.mrb[0].mxu0 %v1154
        %v1291 = vpop.f32.mrb[0].mxu0
        %v1292 = vadd.f32 0.0, %v1291
        %v1293 = vpop.f32.mrb[0].mxu0
        %v1294 = vadd.f32 0.0, %v1293
        %1295 = vmatprep.mubr.f32.mxu0 0.0
        %1296 = vmatmul.mubr.f32.gmra.mrb[0].mxu0 %v1157
        %v1297 = vpop.f32.mrb[0].mxu0
        %v1298 = vadd.f32 0.0, %v1297
        %v1299 = vpop.f32.mrb[0].mxu0
        %v1300 = vadd.f32 0.0, %v1299
        %1301 = vmatprep.mubr.f32.mxu0 0.0
        %1302 = vmatmul.mubr.f32.gmra.mrb[0].mxu0 %v1160
        %v1303 = vpop.f32.mrb[0].mxu0
        %v1304 = vadd.f32 0.0, %v1303
        %v1305 = vpop.f32.mrb[0].mxu0
        %v1306 = vadd.f32 0.0, %v1305
        %1307 = vmatprep.mubr.f32.mxu0 0.0
        %1308 = vmatmul.mubr.f32.gmra.mrb[0].mxu0 %v1163
        %v1309 = vpop.f32.mrb[0].mxu0
        %v1310 = vadd.f32 0.0, %v1309
        %v1311 = vpop.f32.mrb[0].mxu0
        %v1312 = vadd.f32 0.0, %v1311
        %1313 = vmatprep.mubr.f32.mxu0 0.0
        %1314 = vmatmul.mubr.f32.gmra.mrb[0].mxu0 %v1166
        %v1315 = vpop.f32.mrb[0].mxu0
        %v1316 = vadd.f32 0.0, %v1315
        %v1317 = vpop.f32.mrb[0].mxu0
        %v1318 = vadd.f32 0.0, %v1317
        %1319 = vmatprep.mubr.f32.mxu0 0.0
        %1320 = vmatmul.mubr.f32.gmra.mrb[0].mxu0 %v1169
        %v1321 = vpop.f32.mrb[0].mxu0
        %v1322 = vadd.f32 0.0, %v1321
        %v1323 = vpop.f32.mrb[0].mxu0
        %v1324 = vadd.f32 0.0, %v1323
        %1325 = vmatprep.mubr.f32.mxu0 0.0
        %1326 = vmatmul.mubr.f32.gmra.mrb[0].mxu0 %v1172
        %v1327 = vpop.f32.mrb[0].mxu0
        %v1328 = vadd.f32 0.0, %v1327
        %v1329 = vpop.f32.mrb[0].mxu0
        %v1330 = vadd.f32 0.0, %v1329
        %1331 = vmatprep.mubr.f32.mxu0 0.0
        %1332 = vmatmul.mubr.f32.gmra.mrb[0].mxu0 %v1175
        %v1333 = vpop.f32.mrb[0].mxu0
        %v1334 = vadd.f32 0.0, %v1333
        %v1335 = vpop.f32.mrb[0].mxu0
        %v1336 = vadd.f32 0.0, %v1335
        %1337 = vdwg.mxu0
        %1338 = vmatprep.subr.mxu0 %v1100
        %1339 = vmatpush1.msra.mxu0 %v1099
        %1340 = vmatprep.subr.mxu0 %v1104
        %1341 = vmatpush1.msra.mxu0 %v1103
        %1342 = vmatprep.subr.mxu0 %v1108
        %1343 = vmatpush1.msra.mxu0 %v1107
        %1344 = vmatprep.subr.mxu0 %v1112
        %1345 = vmatpush1.msra.mxu0 %v1111
        %1346 = vmatprep.subr.mxu0 %v1116
        %1347 = vmatpush1.msra.mxu0 %v1115
        %1348 = vmatprep.subr.mxu0 %v1120
        %1349 = vmatpush1.msra.mxu0 %v1119
        %1350 = vmatprep.subr.mxu0 %v1124
        %1351 = vmatpush1.msra.mxu0 %v1123
        %1352 = vmatprep.subr.mxu0 %v1128
        %1353 = vmatpush1.msra.mxu0 %v1127
        %1354 = vmatprep.subr.mxu0 0.0
        %1355 = vmatpush1.msra.mxu0 0.0
        %1356 = vmatprep.subr.mxu0 0.0
        %1357 = vmatpush1.msra.mxu0 0.0
        %1358 = vmatprep.subr.mxu0 0.0
        %1359 = vmatpush1.msra.mxu0 0.0
        %1360 = vmatprep.subr.mxu0 0.0
        %1361 = vmatpush1.msra.mxu0 0.0
        %1362 = vmatprep.subr.mxu0 0.0
        %1363 = vmatpush1.msra.mxu0 0.0
        %1364 = vmatprep.subr.mxu0 0.0
        %1365 = vmatpush1.msra.mxu0 0.0
        %1366 = vmatprep.subr.mxu0 0.0
        %1367 = vmatpush1.msra.mxu0 0.0
        %1368 = vmatprep.subr.mxu0 0.0
        %1369 = vmatpush1.msra.mxu0 0.0
        %1370 = vmatprep.subr.mxu0 0.0
        %1371 = vmatpush1.msra.mxu0 0.0
        %1372 = vmatprep.subr.mxu0 0.0
        %1373 = vmatpush1.msra.mxu0 0.0
        %1374 = vmatprep.subr.mxu0 0.0
        %1375 = vmatpush1.msra.mxu0 0.0
        %1376 = vmatprep.subr.mxu0 0.0
        %1377 = vmatpush1.msra.mxu0 0.0
        %1378 = vmatprep.subr.mxu0 0.0
        %1379 = vmatpush1.msra.mxu0 0.0
        %1380 = vmatprep.subr.mxu0 0.0
        %1381 = vmatpush1.msra.mxu0 0.0
        %1382 = vmatprep.subr.mxu0 0.0
        %1383 = vmatpush1.msra.mxu0 0.0
        %1384 = vmatprep.subr.mxu0 0.0
        %1385 = vmatpush1.msra.mxu0 0.0
        %1386 = vmatprep.subr.mxu0 0.0
        %1387 = vmatpush1.msra.mxu0 0.0
        %1388 = vmatprep.subr.mxu0 0.0
        %1389 = vmatpush1.msra.mxu0 0.0
        %1390 = vmatprep.subr.mxu0 0.0
        %1391 = vmatpush1.msra.mxu0 0.0
        %1392 = vmatprep.subr.mxu0 0.0
        %1393 = vmatpush1.msra.mxu0 0.0
        %1394 = vmatprep.subr.mxu0 0.0
        %1395 = vmatpush1.msra.mxu0 0.0
        %1396 = vmatprep.subr.mxu0 0.0
        %1397 = vmatpush1.msra.mxu0 0.0
        %1398 = vmatprep.subr.mxu0 0.0
        %1399 = vmatpush1.msra.mxu0 0.0
        %1400 = vmatprep.subr.mxu0 0.0
        %1401 = vmatpush1.msra.mxu0 0.0
        %1402 = vmatprep.mubr.f32.mxu0 0.0
        %1403 = vmatmul.mubr.f32.gmra.mrb[0].mxu0 %v1130
        %v1404 = vpop.f32.mrb[0].mxu0
        %v1405 = vadd.f32 0.0, %v1404
        %v1406 = vpop.f32.mrb[0].mxu0
        %v1407 = vadd.f32 0.0, %v1406
        %1408 = vmatprep.mubr.f32.mxu0 0.0
        %1409 = vmatmul.mubr.f32.gmra.mrb[0].mxu0 %v1133
        %v1410 = vpop.f32.mrb[0].mxu0
        %v1411 = vadd.f32 0.0, %v1410
        %v1412 = vpop.f32.mrb[0].mxu0
        %v1413 = vadd.f32 0.0, %v1412
        %1414 = vmatprep.mubr.f32.mxu0 0.0
        %1415 = vmatmul.mubr.f32.gmra.mrb[0].mxu0 %v1136
        %v1416 = vpop.f32.mrb[0].mxu0
        %v1417 = vadd.f32 0.0, %v1416
        %v1418 = vpop.f32.mrb[0].mxu0
        %v1419 = vadd.f32 0.0, %v1418
        %1420 = vmatprep.mubr.f32.mxu0 0.0
        %1421 = vmatmul.mubr.f32.gmra.mrb[0].mxu0 %v1139
        %v1422 = vpop.f32.mrb[0].mxu0
        %v1423 = vadd.f32 0.0, %v1422
        %v1424 = vpop.f32.mrb[0].mxu0
        %v1425 = vadd.f32 0.0, %v1424
        %1426 = vmatprep.mubr.f32.mxu0 0.0
        %1427 = vmatmul.mubr.f32.gmra.mrb[0].mxu0 %v1142
        %v1428 = vpop.f32.mrb[0].mxu0
        %v1429 = vadd.f32 0.0, %v1428
        %v1430 = vpop.f32.mrb[0].mxu0
        %v1431 = vadd.f32 0.0, %v1430
        %1432 = vmatprep.mubr.f32.mxu0 0.0
        %1433 = vmatmul.mubr.f32.gmra.mrb[0].mxu0 %v1145
        %v1434 = vpop.f32.mrb[0].mxu0
        %v1435 = vadd.f32 0.0, %v1434
        %v1436 = vpop.f32.mrb[0].mxu0
        %v1437 = vadd.f32 0.0, %v1436
        %1438 = vmatprep.mubr.f32.mxu0 0.0
        %1439 = vmatmul.mubr.f32.gmra.mrb[0].mxu0 %v1148
        %v1440 = vpop.f32.mrb[0].mxu0
        %v1441 = vadd.f32 0.0, %v1440
        %v1442 = vpop.f32.mrb[0].mxu0
        %v1443 = vadd.f32 0.0, %v1442
        %1444 = vmatprep.mubr.f32.mxu0 0.0
        %1445 = vmatmul.mubr.f32.gmra.mrb[0].mxu0 %v1151
        %v1446 = vpop.f32.mrb[0].mxu0
        %v1447 = vadd.f32 0.0, %v1446
        %v1448 = vpop.f32.mrb[0].mxu0
        %v1449 = vadd.f32 0.0, %v1448
        %1450 = vmatprep.mubr.f32.mxu0 0.0
        %1451 = vmatmul.mubr.f32.gmra.mrb[0].mxu0 %v1154
        %v1452 = vpop.f32.mrb[0].mxu0
        %v1453 = vadd.f32 0.0, %v1452
        %v1454 = vpop.f32.mrb[0].mxu0
        %v1455 = vadd.f32 0.0, %v1454
        %1456 = vmatprep.mubr.f32.mxu0 0.0
        %1457 = vmatmul.mubr.f32.gmra.mrb[0].mxu0 %v1157
        %v1458 = vpop.f32.mrb[0].mxu0
        %v1459 = vadd.f32 0.0, %v1458
        %v1460 = vpop.f32.mrb[0].mxu0
        %v1461 = vadd.f32 0.0, %v1460
        %1462 = vmatprep.mubr.f32.mxu0 0.0
        %1463 = vmatmul.mubr.f32.gmra.mrb[0].mxu0 %v1160
        %v1464 = vpop.f32.mrb[0].mxu0
        %v1465 = vadd.f32 0.0, %v1464
        %v1466 = vpop.f32.mrb[0].mxu0
        %v1467 = vadd.f32 0.0, %v1466
        %1468 = vmatprep.mubr.f32.mxu0 0.0
        %1469 = vmatmul.mubr.f32.gmra.mrb[0].mxu0 %v1163
        %v1470 = vpop.f32.mrb[0].mxu0
        %v1471 = vadd.f32 0.0, %v1470
        %v1472 = vpop.f32.mrb[0].mxu0
        %v1473 = vadd.f32 0.0, %v1472
        %1474 = vmatprep.mubr.f32.mxu0 0.0
        %1475 = vmatmul.mubr.f32.gmra.mrb[0].mxu0 %v1166
        %v1476 = vpop.f32.mrb[0].mxu0
        %v1477 = vadd.f32 0.0, %v1476
        %v1478 = vpop.f32.mrb[0].mxu0
        %v1479 = vadd.f32 0.0, %v1478
        %1480 = vmatprep.mubr.f32.mxu0 0.0
        %1481 = vmatmul.mubr.f32.gmra.mrb[0].mxu0 %v1169
        %v1482 = vpop.f32.mrb[0].mxu0
        %v1483 = vadd.f32 0.0, %v1482
        %v1484 = vpop.f32.mrb[0].mxu0
        %v1485 = vadd.f32 0.0, %v1484
        %1486 = vmatprep.mubr.f32.mxu0 0.0
        %1487 = vmatmul.mubr.f32.gmra.mrb[0].mxu0 %v1172
        %v1488 = vpop.f32.mrb[0].mxu0
        %v1489 = vadd.f32 0.0, %v1488
        %v1490 = vpop.f32.mrb[0].mxu0
        %v1491 = vadd.f32 0.0, %v1490
        %1492 = vmatprep.mubr.f32.mxu0 0.0
        %1493 = vmatmul.mubr.f32.gmra.mrb[0].mxu0 %v1175
        %v1494 = vpop.f32.mrb[0].mxu0
        %v1495 = vadd.f32 0.0, %v1494
        %v1496 = vpop.f32.mrb[0].mxu0
        %v1497 = vadd.f32 0.0, %v1496
        %1498 = vdwg.mxu0
        %v1499 = vadd.f32 %v826, %v1244
        %v1500 = vadd.f32 %v828, %v1246
        %v1501 = vadd.f32 %v987, %v1405
        %v1502 = vadd.f32 %v989, %v1407
        %v1503 = vadd.f32 %v832, %v1250
        %v1504 = vadd.f32 %v834, %v1252
        %v1505 = vadd.f32 %v993, %v1411
        %v1506 = vadd.f32 %v995, %v1413
        %v1507 = vadd.f32 %v838, %v1256
        %v1508 = vadd.f32 %v840, %v1258
        %v1509 = vadd.f32 %v999, %v1417
        %v1510 = vadd.f32 %v1001, %v1419
        %v1511 = vadd.f32 %v844, %v1262
        %v1512 = vadd.f32 %v846, %v1264
        %v1513 = vadd.f32 %v1005, %v1423
        %v1514 = vadd.f32 %v1007, %v1425
        %v1515 = vadd.f32 %v850, %v1268
        %v1516 = vadd.f32 %v852, %v1270
        %v1517 = vadd.f32 %v1011, %v1429
        %v1518 = vadd.f32 %v1013, %v1431
        %v1519 = vadd.f32 %v856, %v1274
        %v1520 = vadd.f32 %v858, %v1276
        %v1521 = vadd.f32 %v1017, %v1435
        %v1522 = vadd.f32 %v1019, %v1437
        %v1523 = vadd.f32 %v862, %v1280
        %v1524 = vadd.f32 %v864, %v1282
        %v1525 = vadd.f32 %v1023, %v1441
        %v1526 = vadd.f32 %v1025, %v1443
        %v1527 = vadd.f32 %v868, %v1286
        %v1528 = vadd.f32 %v870, %v1288
        %v1529 = vadd.f32 %v1029, %v1447
        %v1530 = vadd.f32 %v1031, %v1449
        %v1531 = vadd.f32 %v874, %v1292
        %v1532 = vadd.f32 %v876, %v1294
        %v1533 = vadd.f32 %v1035, %v1453
        %v1534 = vadd.f32 %v1037, %v1455
        %v1535 = vadd.f32 %v880, %v1298
        %v1536 = vadd.f32 %v882, %v1300
        %v1537 = vadd.f32 %v1041, %v1459
        %v1538 = vadd.f32 %v1043, %v1461
        %v1539 = vadd.f32 %v886, %v1304
        %v1540 = vadd.f32 %v888, %v1306
        %v1541 = vadd.f32 %v1047, %v1465
        %v1542 = vadd.f32 %v1049, %v1467
        %v1543 = vadd.f32 %v892, %v1310
        %v1544 = vadd.f32 %v894, %v1312
        %v1545 = vadd.f32 %v1053, %v1471
        %v1546 = vadd.f32 %v1055, %v1473
        %v1547 = vadd.f32 %v898, %v1316
        %v1548 = vadd.f32 %v900, %v1318
        %v1549 = vadd.f32 %v1059, %v1477
        %v1550 = vadd.f32 %v1061, %v1479
        %v1551 = vadd.f32 %v904, %v1322
        %v1552 = vadd.f32 %v906, %v1324
        %v1553 = vadd.f32 %v1065, %v1483
        %v1554 = vadd.f32 %v1067, %v1485
        %v1555 = vadd.f32 %v910, %v1328
        %v1556 = vadd.f32 %v912, %v1330
        %v1557 = vadd.f32 %v1071, %v1489
        %v1558 = vadd.f32 %v1073, %v1491
        %v1559 = vadd.f32 %v916, %v1334
        %v1560 = vadd.f32 %v918, %v1336
        %v1561 = vadd.f32 %v1077, %v1495
        %v1562 = vadd.f32 %v1079, %v1497
        %v1563 = vld [vmem:[#allocation2 + $0x3] sm:$0xff]
        %v1564 = vld [vmem:[#allocation2 + $0xb] sm:$0xff]
        %v1565 = vld [vmem:[#allocation2 + $0x13] sm:$0xff]
        %v1566 = vld [vmem:[#allocation2 + $0x1b] sm:$0xff]
        %v1567 = vld [vmem:[#allocation2 + $0x23] sm:$0xff]
        %v1568 = vld [vmem:[#allocation2 + $0x2b] sm:$0xff]
        %v1569 = vld [vmem:[#allocation2 + $0x33] sm:$0xff]
        %v1570 = vld [vmem:[#allocation2 + $0x3b] sm:$0xff]
        %v1571 = vld [vmem:[#allocation2 + $0x43] sm:$0xff]
        %v1572 = vld [vmem:[#allocation2 + $0x4b] sm:$0xff]
        %v1573 = vld [vmem:[#allocation2 + $0x53] sm:$0xff]
        %v1574 = vld [vmem:[#allocation2 + $0x5b] sm:$0xff]
        %v1575 = vld [vmem:[#allocation2 + $0x63] sm:$0xff]
        %v1576 = vld [vmem:[#allocation2 + $0x6b] sm:$0xff]
        %v1577 = vld [vmem:[#allocation2 + $0x73] sm:$0xff]
        %v1578 = vld [vmem:[#allocation2 + $0x7b] sm:$0xff]
        %v1579 = vld [vmem:[#allocation4 + $0x300] sm:$0xff]
        %v1580 = vld [vmem:[#allocation4 + $0x308] sm:$0xff]
        %v1581 = vld [vmem:[#allocation4 + $0x310] sm:$0xff]
        %v1582 = vld [vmem:[#allocation4 + $0x318] sm:$0xff]
        %v1583 = vld [vmem:[#allocation4 + $0x320] sm:$0xff]
        %v1584 = vld [vmem:[#allocation4 + $0x328] sm:$0xff]
        %v1585 = vld [vmem:[#allocation4 + $0x330] sm:$0xff]
        %v1586 = vld [vmem:[#allocation4 + $0x338] sm:$0xff]
        %v1587 = vld [vmem:[#allocation4 + $0x340] sm:$0xff]
        %v1588 = vld [vmem:[#allocation4 + $0x348] sm:$0xff]
        %v1589 = vld [vmem:[#allocation4 + $0x350] sm:$0xff]
        %v1590 = vld [vmem:[#allocation4 + $0x358] sm:$0xff]
        %v1591 = vld [vmem:[#allocation4 + $0x360] sm:$0xff]
        %v1592 = vld [vmem:[#allocation4 + $0x368] sm:$0xff]
        %v1593 = vld [vmem:[#allocation4 + $0x370] sm:$0xff]
        %v1594 = vld [vmem:[#allocation4 + $0x378] sm:$0xff]
        %v1595 = vld [vmem:[#allocation4 + $0x380] sm:$0xff]
        %v1596 = vld [vmem:[#allocation4 + $0x388] sm:$0xff]
        %v1597 = vld [vmem:[#allocation4 + $0x390] sm:$0xff]
        %v1598 = vld [vmem:[#allocation4 + $0x398] sm:$0xff]
        %v1599 = vld [vmem:[#allocation4 + $0x3a0] sm:$0xff]
        %v1600 = vld [vmem:[#allocation4 + $0x3a8] sm:$0xff]
        %v1601 = vld [vmem:[#allocation4 + $0x3b0] sm:$0xff]
        %v1602 = vld [vmem:[#allocation4 + $0x3b8] sm:$0xff]
        %v1603 = vld [vmem:[#allocation4 + $0x3c0] sm:$0xff]
        %v1604 = vld [vmem:[#allocation4 + $0x3c8] sm:$0xff]
        %v1605 = vld [vmem:[#allocation4 + $0x3d0] sm:$0xff]
        %v1606 = vld [vmem:[#allocation4 + $0x3d8] sm:$0xff]
        %v1607 = vld [vmem:[#allocation4 + $0x3e0] sm:$0xff]
        %v1608 = vld [vmem:[#allocation4 + $0x3e8] sm:$0xff]
        %v1609 = vld [vmem:[#allocation4 + $0x3f0] sm:$0xff]
        %v1610 = vld [vmem:[#allocation4 + $0x3f8] sm:$0xff]
        %v1612 = vsel %vm340, %v1563, 0
        %v1615 = vsel %vm340, %v1564, 0
        %v1618 = vsel %vm340, %v1565, 0
        %v1621 = vsel %vm340, %v1566, 0
        %v1624 = vsel %vm340, %v1567, 0
        %v1627 = vsel %vm340, %v1568, 0
        %v1630 = vsel %vm340, %v1569, 0
        %v1633 = vsel %vm340, %v1570, 0
        %v1636 = vsel %vm340, %v1571, 0
        %v1639 = vsel %vm340, %v1572, 0
        %v1642 = vsel %vm340, %v1573, 0
        %v1645 = vsel %vm340, %v1574, 0
        %v1648 = vsel %vm340, %v1575, 0
        %v1651 = vsel %vm340, %v1576, 0
        %v1654 = vsel %vm340, %v1577, 0
        %v1657 = vsel %vm340, %v1578, 0
        %1659 = vmatprep.subr.mxu0 %v1580
        %1660 = vmatpush1.msra.mxu0 %v1579
        %1661 = vmatprep.subr.mxu0 %v1584
        %1662 = vmatpush1.msra.mxu0 %v1583
        %1663 = vmatprep.subr.mxu0 %v1588
        %1664 = vmatpush1.msra.mxu0 %v1587
        %1665 = vmatprep.subr.mxu0 %v1592
        %1666 = vmatpush1.msra.mxu0 %v1591
        %1667 = vmatprep.subr.mxu0 %v1596
        %1668 = vmatpush1.msra.mxu0 %v1595
        %1669 = vmatprep.subr.mxu0 %v1600
        %1670 = vmatpush1.msra.mxu0 %v1599
        %1671 = vmatprep.subr.mxu0 %v1604
        %1672 = vmatpush1.msra.mxu0 %v1603
        %1673 = vmatprep.subr.mxu0 %v1608
        %1674 = vmatpush1.msra.mxu0 %v1607
        %1675 = vmatprep.subr.mxu0 0.0
        %1676 = vmatpush1.msra.mxu0 0.0
        %1677 = vmatprep.subr.mxu0 0.0
        %1678 = vmatpush1.msra.mxu0 0.0
        %1679 = vmatprep.subr.mxu0 0.0
        %1680 = vmatpush1.msra.mxu0 0.0
        %1681 = vmatprep.subr.mxu0 0.0
        %1682 = vmatpush1.msra.mxu0 0.0
        %1683 = vmatprep.subr.mxu0 0.0
        %1684 = vmatpush1.msra.mxu0 0.0
        %1685 = vmatprep.subr.mxu0 0.0
        %1686 = vmatpush1.msra.mxu0 0.0
        %1687 = vmatprep.subr.mxu0 0.0
        %1688 = vmatpush1.msra.mxu0 0.0
        %1689 = vmatprep.subr.mxu0 0.0
        %1690 = vmatpush1.msra.mxu0 0.0
        %1691 = vmatprep.subr.mxu0 0.0
        %1692 = vmatpush1.msra.mxu0 0.0
        %1693 = vmatprep.subr.mxu0 0.0
        %1694 = vmatpush1.msra.mxu0 0.0
        %1695 = vmatprep.subr.mxu0 0.0
        %1696 = vmatpush1.msra.mxu0 0.0
        %1697 = vmatprep.subr.mxu0 0.0
        %1698 = vmatpush1.msra.mxu0 0.0
        %1699 = vmatprep.subr.mxu0 0.0
        %1700 = vmatpush1.msra.mxu0 0.0
        %1701 = vmatprep.subr.mxu0 0.0
        %1702 = vmatpush1.msra.mxu0 0.0
        %1703 = vmatprep.subr.mxu0 0.0
        %1704 = vmatpush1.msra.mxu0 0.0
        %1705 = vmatprep.subr.mxu0 0.0
        %1706 = vmatpush1.msra.mxu0 0.0
        %1707 = vmatprep.subr.mxu0 0.0
        %1708 = vmatpush1.msra.mxu0 0.0
        %1709 = vmatprep.subr.mxu0 0.0
        %1710 = vmatpush1.msra.mxu0 0.0
        %1711 = vmatprep.subr.mxu0 0.0
        %1712 = vmatpush1.msra.mxu0 0.0
        %1713 = vmatprep.subr.mxu0 0.0
        %1714 = vmatpush1.msra.mxu0 0.0
        %1715 = vmatprep.subr.mxu0 0.0
        %1716 = vmatpush1.msra.mxu0 0.0
        %1717 = vmatprep.subr.mxu0 0.0
        %1718 = vmatpush1.msra.mxu0 0.0
        %1719 = vmatprep.subr.mxu0 0.0
        %1720 = vmatpush1.msra.mxu0 0.0
        %1721 = vmatprep.subr.mxu0 0.0
        %1722 = vmatpush1.msra.mxu0 0.0
        %1723 = vmatprep.mubr.f32.mxu0 0.0
        %1724 = vmatmul.mubr.f32.gmra.mrb[0].mxu0 %v1612
        %v1725 = vpop.f32.mrb[0].mxu0
        %v1726 = vadd.f32 0.0, %v1725
        %v1727 = vpop.f32.mrb[0].mxu0
        %v1728 = vadd.f32 0.0, %v1727
        %1729 = vmatprep.mubr.f32.mxu0 0.0
        %1730 = vmatmul.mubr.f32.gmra.mrb[0].mxu0 %v1615
        %v1731 = vpop.f32.mrb[0].mxu0
        %v1732 = vadd.f32 0.0, %v1731
        %v1733 = vpop.f32.mrb[0].mxu0
        %v1734 = vadd.f32 0.0, %v1733
        %1735 = vmatprep.mubr.f32.mxu0 0.0
        %1736 = vmatmul.mubr.f32.gmra.mrb[0].mxu0 %v1618
        %v1737 = vpop.f32.mrb[0].mxu0
        %v1738 = vadd.f32 0.0, %v1737
        %v1739 = vpop.f32.mrb[0].mxu0
        %v1740 = vadd.f32 0.0, %v1739
        %1741 = vmatprep.mubr.f32.mxu0 0.0
        %1742 = vmatmul.mubr.f32.gmra.mrb[0].mxu0 %v1621
        %v1743 = vpop.f32.mrb[0].mxu0
        %v1744 = vadd.f32 0.0, %v1743
        %v1745 = vpop.f32.mrb[0].mxu0
        %v1746 = vadd.f32 0.0, %v1745
        %1747 = vmatprep.mubr.f32.mxu0 0.0
        %1748 = vmatmul.mubr.f32.gmra.mrb[0].mxu0 %v1624
        %v1749 = vpop.f32.mrb[0].mxu0
        %v1750 = vadd.f32 0.0, %v1749
        %v1751 = vpop.f32.mrb[0].mxu0
        %v1752 = vadd.f32 0.0, %v1751
        %1753 = vmatprep.mubr.f32.mxu0 0.0
        %1754 = vmatmul.mubr.f32.gmra.mrb[0].mxu0 %v1627
        %v1755 = vpop.f32.mrb[0].mxu0
        %v1756 = vadd.f32 0.0, %v1755
        %v1757 = vpop.f32.mrb[0].mxu0
        %v1758 = vadd.f32 0.0, %v1757
        %1759 = vmatprep.mubr.f32.mxu0 0.0
        %1760 = vmatmul.mubr.f32.gmra.mrb[0].mxu0 %v1630
        %v1761 = vpop.f32.mrb[0].mxu0
        %v1762 = vadd.f32 0.0, %v1761
        %v1763 = vpop.f32.mrb[0].mxu0
        %v1764 = vadd.f32 0.0, %v1763
        %1765 = vmatprep.mubr.f32.mxu0 0.0
        %1766 = vmatmul.mubr.f32.gmra.mrb[0].mxu0 %v1633
        %v1767 = vpop.f32.mrb[0].mxu0
        %v1768 = vadd.f32 0.0, %v1767
        %v1769 = vpop.f32.mrb[0].mxu0
        %v1770 = vadd.f32 0.0, %v1769
        %1771 = vmatprep.mubr.f32.mxu0 0.0
        %1772 = vmatmul.mubr.f32.gmra.mrb[0].mxu0 %v1636
        %v1773 = vpop.f32.mrb[0].mxu0
        %v1774 = vadd.f32 0.0, %v1773
        %v1775 = vpop.f32.mrb[0].mxu0
        %v1776 = vadd.f32 0.0, %v1775
        %1777 = vmatprep.mubr.f32.mxu0 0.0
        %1778 = vmatmul.mubr.f32.gmra.mrb[0].mxu0 %v1639
        %v1779 = vpop.f32.mrb[0].mxu0
        %v1780 = vadd.f32 0.0, %v1779
        %v1781 = vpop.f32.mrb[0].mxu0
        %v1782 = vadd.f32 0.0, %v1781
        %1783 = vmatprep.mubr.f32.mxu0 0.0
        %1784 = vmatmul.mubr.f32.gmra.mrb[0].mxu0 %v1642
        %v1785 = vpop.f32.mrb[0].mxu0
        %v1786 = vadd.f32 0.0, %v1785
        %v1787 = vpop.f32.mrb[0].mxu0
        %v1788 = vadd.f32 0.0, %v1787
        %1789 = vmatprep.mubr.f32.mxu0 0.0
        %1790 = vmatmul.mubr.f32.gmra.mrb[0].mxu0 %v1645
        %v1791 = vpop.f32.mrb[0].mxu0
        %v1792 = vadd.f32 0.0, %v1791
        %v1793 = vpop.f32.mrb[0].mxu0
        %v1794 = vadd.f32 0.0, %v1793
        %1795 = vmatprep.mubr.f32.mxu0 0.0
        %1796 = vmatmul.mubr.f32.gmra.mrb[0].mxu0 %v1648
        %v1797 = vpop.f32.mrb[0].mxu0
        %v1798 = vadd.f32 0.0, %v1797
        %v1799 = vpop.f32.mrb[0].mxu0
        %v1800 = vadd.f32 0.0, %v1799
        %1801 = vmatprep.mubr.f32.mxu0 0.0
        %1802 = vmatmul.mubr.f32.gmra.mrb[0].mxu0 %v1651
        %v1803 = vpop.f32.mrb[0].mxu0
        %v1804 = vadd.f32 0.0, %v1803
        %v1805 = vpop.f32.mrb[0].mxu0
        %v1806 = vadd.f32 0.0, %v1805
        %1807 = vmatprep.mubr.f32.mxu0 0.0
        %1808 = vmatmul.mubr.f32.gmra.mrb[0].mxu0 %v1654
        %v1809 = vpop.f32.mrb[0].mxu0
        %v1810 = vadd.f32 0.0, %v1809
        %v1811 = vpop.f32.mrb[0].mxu0
        %v1812 = vadd.f32 0.0, %v1811
        %1813 = vmatprep.mubr.f32.mxu0 0.0
        %1814 = vmatmul.mubr.f32.gmra.mrb[0].mxu0 %v1657
        %v1815 = vpop.f32.mrb[0].mxu0
        %v1816 = vadd.f32 0.0, %v1815
        %v1817 = vpop.f32.mrb[0].mxu0
        %v1818 = vadd.f32 0.0, %v1817
        %1819 = vdwg.mxu0
        %1820 = vmatprep.subr.mxu0 %v1582
        %1821 = vmatpush1.msra.mxu0 %v1581
        %1822 = vmatprep.subr.mxu0 %v1586
        %1823 = vmatpush1.msra.mxu0 %v1585
        %1824 = vmatprep.subr.mxu0 %v1590
        %1825 = vmatpush1.msra.mxu0 %v1589
        %1826 = vmatprep.subr.mxu0 %v1594
        %1827 = vmatpush1.msra.mxu0 %v1593
        %1828 = vmatprep.subr.mxu0 %v1598
        %1829 = vmatpush1.msra.mxu0 %v1597
        %1830 = vmatprep.subr.mxu0 %v1602
        %1831 = vmatpush1.msra.mxu0 %v1601
        %1832 = vmatprep.subr.mxu0 %v1606
        %1833 = vmatpush1.msra.mxu0 %v1605
        %1834 = vmatprep.subr.mxu0 %v1610
        %1835 = vmatpush1.msra.mxu0 %v1609
        %1836 = vmatprep.subr.mxu0 0.0
        %1837 = vmatpush1.msra.mxu0 0.0
        %1838 = vmatprep.subr.mxu0 0.0
        %1839 = vmatpush1.msra.mxu0 0.0
        %1840 = vmatprep.subr.mxu0 0.0
        %1841 = vmatpush1.msra.mxu0 0.0
        %1842 = vmatprep.subr.mxu0 0.0
        %1843 = vmatpush1.msra.mxu0 0.0
        %1844 = vmatprep.subr.mxu0 0.0
        %1845 = vmatpush1.msra.mxu0 0.0
        %1846 = vmatprep.subr.mxu0 0.0
        %1847 = vmatpush1.msra.mxu0 0.0
        %1848 = vmatprep.subr.mxu0 0.0
        %1849 = vmatpush1.msra.mxu0 0.0
        %1850 = vmatprep.subr.mxu0 0.0
        %1851 = vmatpush1.msra.mxu0 0.0
        %1852 = vmatprep.subr.mxu0 0.0
        %1853 = vmatpush1.msra.mxu0 0.0
        %1854 = vmatprep.subr.mxu0 0.0
        %1855 = vmatpush1.msra.mxu0 0.0
        %1856 = vmatprep.subr.mxu0 0.0
        %1857 = vmatpush1.msra.mxu0 0.0
        %1858 = vmatprep.subr.mxu0 0.0
        %1859 = vmatpush1.msra.mxu0 0.0
        %1860 = vmatprep.subr.mxu0 0.0
        %1861 = vmatpush1.msra.mxu0 0.0
        %1862 = vmatprep.subr.mxu0 0.0
        %1863 = vmatpush1.msra.mxu0 0.0
        %1864 = vmatprep.subr.mxu0 0.0
        %1865 = vmatpush1.msra.mxu0 0.0
        %1866 = vmatprep.subr.mxu0 0.0
        %1867 = vmatpush1.msra.mxu0 0.0
        %1868 = vmatprep.subr.mxu0 0.0
        %1869 = vmatpush1.msra.mxu0 0.0
        %1870 = vmatprep.subr.mxu0 0.0
        %1871 = vmatpush1.msra.mxu0 0.0
        %1872 = vmatprep.subr.mxu0 0.0
        %1873 = vmatpush1.msra.mxu0 0.0
        %1874 = vmatprep.subr.mxu0 0.0
        %1875 = vmatpush1.msra.mxu0 0.0
        %1876 = vmatprep.subr.mxu0 0.0
        %1877 = vmatpush1.msra.mxu0 0.0
        %1878 = vmatprep.subr.mxu0 0.0
        %1879 = vmatpush1.msra.mxu0 0.0
        %1880 = vmatprep.subr.mxu0 0.0
        %1881 = vmatpush1.msra.mxu0 0.0
        %1882 = vmatprep.subr.mxu0 0.0
        %1883 = vmatpush1.msra.mxu0 0.0
        %1884 = vmatprep.mubr.f32.mxu0 0.0
        %1885 = vmatmul.mubr.f32.gmra.mrb[0].mxu0 %v1612
        %v1886 = vpop.f32.mrb[0].mxu0
        %v1887 = vadd.f32 0.0, %v1886
        %v1888 = vpop.f32.mrb[0].mxu0
        %v1889 = vadd.f32 0.0, %v1888
        %1890 = vmatprep.mubr.f32.mxu0 0.0
        %1891 = vmatmul.mubr.f32.gmra.mrb[0].mxu0 %v1615
        %v1892 = vpop.f32.mrb[0].mxu0
        %v1893 = vadd.f32 0.0, %v1892
        %v1894 = vpop.f32.mrb[0].mxu0
        %v1895 = vadd.f32 0.0, %v1894
        %1896 = vmatprep.mubr.f32.mxu0 0.0
        %1897 = vmatmul.mubr.f32.gmra.mrb[0].mxu0 %v1618
        %v1898 = vpop.f32.mrb[0].mxu0
        %v1899 = vadd.f32 0.0, %v1898
        %v1900 = vpop.f32.mrb[0].mxu0
        %v1901 = vadd.f32 0.0, %v1900
        %1902 = vmatprep.mubr.f32.mxu0 0.0
        %1903 = vmatmul.mubr.f32.gmra.mrb[0].mxu0 %v1621
        %v1904 = vpop.f32.mrb[0].mxu0
        %v1905 = vadd.f32 0.0, %v1904
        %v1906 = vpop.f32.mrb[0].mxu0
        %v1907 = vadd.f32 0.0, %v1906
        %1908 = vmatprep.mubr.f32.mxu0 0.0
        %1909 = vmatmul.mubr.f32.gmra.mrb[0].mxu0 %v1624
        %v1910 = vpop.f32.mrb[0].mxu0
        %v1911 = vadd.f32 0.0, %v1910
        %v1912 = vpop.f32.mrb[0].mxu0
        %v1913 = vadd.f32 0.0, %v1912
        %1914 = vmatprep.mubr.f32.mxu0 0.0
        %1915 = vmatmul.mubr.f32.gmra.mrb[0].mxu0 %v1627
        %v1916 = vpop.f32.mrb[0].mxu0
        %v1917 = vadd.f32 0.0, %v1916
        %v1918 = vpop.f32.mrb[0].mxu0
        %v1919 = vadd.f32 0.0, %v1918
        %1920 = vmatprep.mubr.f32.mxu0 0.0
        %1921 = vmatmul.mubr.f32.gmra.mrb[0].mxu0 %v1630
        %v1922 = vpop.f32.mrb[0].mxu0
        %v1923 = vadd.f32 0.0, %v1922
        %v1924 = vpop.f32.mrb[0].mxu0
        %v1925 = vadd.f32 0.0, %v1924
        %1926 = vmatprep.mubr.f32.mxu0 0.0
        %1927 = vmatmul.mubr.f32.gmra.mrb[0].mxu0 %v1633
        %v1928 = vpop.f32.mrb[0].mxu0
        %v1929 = vadd.f32 0.0, %v1928
        %v1930 = vpop.f32.mrb[0].mxu0
        %v1931 = vadd.f32 0.0, %v1930
        %1932 = vmatprep.mubr.f32.mxu0 0.0
        %1933 = vmatmul.mubr.f32.gmra.mrb[0].mxu0 %v1636
        %v1934 = vpop.f32.mrb[0].mxu0
        %v1935 = vadd.f32 0.0, %v1934
        %v1936 = vpop.f32.mrb[0].mxu0
        %v1937 = vadd.f32 0.0, %v1936
        %1938 = vmatprep.mubr.f32.mxu0 0.0
        %1939 = vmatmul.mubr.f32.gmra.mrb[0].mxu0 %v1639
        %v1940 = vpop.f32.mrb[0].mxu0
        %v1941 = vadd.f32 0.0, %v1940
        %v1942 = vpop.f32.mrb[0].mxu0
        %v1943 = vadd.f32 0.0, %v1942
        %1944 = vmatprep.mubr.f32.mxu0 0.0
        %1945 = vmatmul.mubr.f32.gmra.mrb[0].mxu0 %v1642
        %v1946 = vpop.f32.mrb[0].mxu0
        %v1947 = vadd.f32 0.0, %v1946
        %v1948 = vpop.f32.mrb[0].mxu0
        %v1949 = vadd.f32 0.0, %v1948
        %1950 = vmatprep.mubr.f32.mxu0 0.0
        %1951 = vmatmul.mubr.f32.gmra.mrb[0].mxu0 %v1645
        %v1952 = vpop.f32.mrb[0].mxu0
        %v1953 = vadd.f32 0.0, %v1952
        %v1954 = vpop.f32.mrb[0].mxu0
        %v1955 = vadd.f32 0.0, %v1954
        %1956 = vmatprep.mubr.f32.mxu0 0.0
        %1957 = vmatmul.mubr.f32.gmra.mrb[0].mxu0 %v1648
        %v1958 = vpop.f32.mrb[0].mxu0
        %v1959 = vadd.f32 0.0, %v1958
        %v1960 = vpop.f32.mrb[0].mxu0
        %v1961 = vadd.f32 0.0, %v1960
        %1962 = vmatprep.mubr.f32.mxu0 0.0
        %1963 = vmatmul.mubr.f32.gmra.mrb[0].mxu0 %v1651
        %v1964 = vpop.f32.mrb[0].mxu0
        %v1965 = vadd.f32 0.0, %v1964
        %v1966 = vpop.f32.mrb[0].mxu0
        %v1967 = vadd.f32 0.0, %v1966
        %1968 = vmatprep.mubr.f32.mxu0 0.0
        %1969 = vmatmul.mubr.f32.gmra.mrb[0].mxu0 %v1654
        %v1970 = vpop.f32.mrb[0].mxu0
        %v1971 = vadd.f32 0.0, %v1970
        %v1972 = vpop.f32.mrb[0].mxu0
        %v1973 = vadd.f32 0.0, %v1972
        %1974 = vmatprep.mubr.f32.mxu0 0.0
        %1975 = vmatmul.mubr.f32.gmra.mrb[0].mxu0 %v1657
        %v1976 = vpop.f32.mrb[0].mxu0
        %v1977 = vadd.f32 0.0, %v1976
        %v1978 = vpop.f32.mrb[0].mxu0
        %v1979 = vadd.f32 0.0, %v1978
        %1980 = vdwg.mxu0
        %v1981 = vadd.f32 %v1499, %v1726
        %v1982 = vadd.f32 %v1500, %v1728
        %v1983 = vadd.f32 %v1501, %v1887
        %v1984 = vadd.f32 %v1502, %v1889
        %v1985 = vadd.f32 %v1503, %v1732
        %v1986 = vadd.f32 %v1504, %v1734
        %v1987 = vadd.f32 %v1505, %v1893
        %v1988 = vadd.f32 %v1506, %v1895
        %v1989 = vadd.f32 %v1507, %v1738
        %v1990 = vadd.f32 %v1508, %v1740
        %v1991 = vadd.f32 %v1509, %v1899
        %v1992 = vadd.f32 %v1510, %v1901
        %v1993 = vadd.f32 %v1511, %v1744
        %v1994 = vadd.f32 %v1512, %v1746
        %v1995 = vadd.f32 %v1513, %v1905
        %v1996 = vadd.f32 %v1514, %v1907
        %v1997 = vadd.f32 %v1515, %v1750
        %v1998 = vadd.f32 %v1516, %v1752
        %v1999 = vadd.f32 %v1517, %v1911
        %v2000 = vadd.f32 %v1518, %v1913
        %v2001 = vadd.f32 %v1519, %v1756
        %v2002 = vadd.f32 %v1520, %v1758
        %v2003 = vadd.f32 %v1521, %v1917
        %v2004 = vadd.f32 %v1522, %v1919
        %v2005 = vadd.f32 %v1523, %v1762
        %v2006 = vadd.f32 %v1524, %v1764
        %v2007 = vadd.f32 %v1525, %v1923
        %v2008 = vadd.f32 %v1526, %v1925
        %v2009 = vadd.f32 %v1527, %v1768
        %v2010 = vadd.f32 %v1528, %v1770
        %v2011 = vadd.f32 %v1529, %v1929
        %v2012 = vadd.f32 %v1530, %v1931
        %v2013 = vadd.f32 %v1531, %v1774
        %v2014 = vadd.f32 %v1532, %v1776
        %v2015 = vadd.f32 %v1533, %v1935
        %v2016 = vadd.f32 %v1534, %v1937
        %v2017 = vadd.f32 %v1535, %v1780
        %v2018 = vadd.f32 %v1536, %v1782
        %v2019 = vadd.f32 %v1537, %v1941
        %v2020 = vadd.f32 %v1538, %v1943
        %v2021 = vadd.f32 %v1539, %v1786
        %v2022 = vadd.f32 %v1540, %v1788
        %v2023 = vadd.f32 %v1541, %v1947
        %v2024 = vadd.f32 %v1542, %v1949
        %v2025 = vadd.f32 %v1543, %v1792
        %v2026 = vadd.f32 %v1544, %v1794
        %v2027 = vadd.f32 %v1545, %v1953
        %v2028 = vadd.f32 %v1546, %v1955
        %v2029 = vadd.f32 %v1547, %v1798
        %v2030 = vadd.f32 %v1548, %v1800
        %v2031 = vadd.f32 %v1549, %v1959
        %v2032 = vadd.f32 %v1550, %v1961
        %v2033 = vadd.f32 %v1551, %v1804
        %v2034 = vadd.f32 %v1552, %v1806
        %v2035 = vadd.f32 %v1553, %v1965
        %v2036 = vadd.f32 %v1554, %v1967
        %v2037 = vadd.f32 %v1555, %v1810
        %v2038 = vadd.f32 %v1556, %v1812
        %v2039 = vadd.f32 %v1557, %v1971
        %v2040 = vadd.f32 %v1558, %v1973
        %v2041 = vadd.f32 %v1559, %v1816
        %v2042 = vadd.f32 %v1560, %v1818
        %v2043 = vadd.f32 %v1561, %v1977
        %v2044 = vadd.f32 %v1562, %v1979
        %v2045 = vmul.f32 %v1981, %v1981
        %v2046 = vmul.f32 %v1982, %v1982
        %v2047 = vmul.f32 %v1985, %v1985
        %v2048 = vmul.f32 %v1986, %v1986
        %v2049 = vmul.f32 %v1989, %v1989
        %v2050 = vmul.f32 %v1990, %v1990
        %v2051 = vmul.f32 %v1993, %v1993
        %v2052 = vmul.f32 %v1994, %v1994
        %v2053 = vmul.f32 %v1997, %v1997
        %v2054 = vmul.f32 %v1998, %v1998
        %v2055 = vmul.f32 %v2001, %v2001
        %v2056 = vmul.f32 %v2002, %v2002
        %v2057 = vmul.f32 %v2005, %v2005
        %v2058 = vmul.f32 %v2006, %v2006
        %v2059 = vmul.f32 %v2009, %v2009
        %v2060 = vmul.f32 %v2010, %v2010
        %v2061 = vmul.f32 %v2013, %v2013
        %v2062 = vmul.f32 %v2014, %v2014
        %v2063 = vmul.f32 %v2017, %v2017
        %v2064 = vmul.f32 %v2018, %v2018
        %v2065 = vmul.f32 %v2021, %v2021
        %v2066 = vmul.f32 %v2022, %v2022
        %v2067 = vmul.f32 %v2025, %v2025
        %v2068 = vmul.f32 %v2026, %v2026
        %v2069 = vmul.f32 %v2029, %v2029
        %v2070 = vmul.f32 %v2030, %v2030
        %v2071 = vmul.f32 %v2033, %v2033
        %v2072 = vmul.f32 %v2034, %v2034
        %v2073 = vmul.f32 %v2037, %v2037
        %v2074 = vmul.f32 %v2038, %v2038
        %v2075 = vmul.f32 %v2041, %v2041
        %v2076 = vmul.f32 %v2042, %v2042
        %v2077 = vmul.f32 %v1983, %v1983
        %v2078 = vmul.f32 %v1984, %v1984
        %v2079 = vmul.f32 %v1987, %v1987
        %v2080 = vmul.f32 %v1988, %v1988
        %v2081 = vmul.f32 %v1991, %v1991
        %v2082 = vmul.f32 %v1992, %v1992
        %v2083 = vmul.f32 %v1995, %v1995
        %v2084 = vmul.f32 %v1996, %v1996
        %v2085 = vmul.f32 %v1999, %v1999
        %v2086 = vmul.f32 %v2000, %v2000
        %v2087 = vmul.f32 %v2003, %v2003
        %v2088 = vmul.f32 %v2004, %v2004
        %v2089 = vmul.f32 %v2007, %v2007
        %v2090 = vmul.f32 %v2008, %v2008
        %v2091 = vmul.f32 %v2011, %v2011
        %v2092 = vmul.f32 %v2012, %v2012
        %v2093 = vmul.f32 %v2015, %v2015
        %v2094 = vmul.f32 %v2016, %v2016
        %v2095 = vmul.f32 %v2019, %v2019
        %v2096 = vmul.f32 %v2020, %v2020
        %v2097 = vmul.f32 %v2023, %v2023
        %v2098 = vmul.f32 %v2024, %v2024
        %v2099 = vmul.f32 %v2027, %v2027
        %v2100 = vmul.f32 %v2028, %v2028
        %v2101 = vmul.f32 %v2031, %v2031
        %v2102 = vmul.f32 %v2032, %v2032
        %v2103 = vmul.f32 %v2035, %v2035
        %v2104 = vmul.f32 %v2036, %v2036
        %v2105 = vmul.f32 %v2039, %v2039
        %v2106 = vmul.f32 %v2040, %v2040
        %v2107 = vmul.f32 %v2043, %v2043
        %v2108 = vmul.f32 %v2044, %v2044
        %v2109 = vadd.f32 %v2045, %v2077
        %v2110 = vadd.f32 %v2046, %v2078
        %v2111 = vadd.f32 %v2047, %v2079
        %v2112 = vadd.f32 %v2048, %v2080
        %v2113 = vadd.f32 %v2049, %v2081
        %v2114 = vadd.f32 %v2050, %v2082
        %v2115 = vadd.f32 %v2051, %v2083
        %v2116 = vadd.f32 %v2052, %v2084
        %v2117 = vadd.f32 %v2053, %v2085
        %v2118 = vadd.f32 %v2054, %v2086
        %v2119 = vadd.f32 %v2055, %v2087
        %v2120 = vadd.f32 %v2056, %v2088
        %v2121 = vadd.f32 %v2057, %v2089
        %v2122 = vadd.f32 %v2058, %v2090
        %v2123 = vadd.f32 %v2059, %v2091
        %v2124 = vadd.f32 %v2060, %v2092
        %v2125 = vadd.f32 %v2061, %v2093
        %v2126 = vadd.f32 %v2062, %v2094
        %v2127 = vadd.f32 %v2063, %v2095
        %v2128 = vadd.f32 %v2064, %v2096
        %v2129 = vadd.f32 %v2065, %v2097
        %v2130 = vadd.f32 %v2066, %v2098
        %v2131 = vadd.f32 %v2067, %v2099
        %v2132 = vadd.f32 %v2068, %v2100
        %v2133 = vadd.f32 %v2069, %v2101
        %v2134 = vadd.f32 %v2070, %v2102
        %v2135 = vadd.f32 %v2071, %v2103
        %v2136 = vadd.f32 %v2072, %v2104
        %v2137 = vadd.f32 %v2073, %v2105
        %v2138 = vadd.f32 %v2074, %v2106
        %v2139 = vadd.f32 %v2075, %v2107
        %v2140 = vadd.f32 %v2076, %v2108
        %v2141 = vadd.f32 %v2109, 1e-06
        %v2142 = vadd.f32 %v2110, 1e-06
        %v2143 = vadd.f32 %v2111, 1e-06
        %v2144 = vadd.f32 %v2112, 1e-06
        %v2145 = vadd.f32 %v2113, 1e-06
        %v2146 = vadd.f32 %v2114, 1e-06
        %v2147 = vadd.f32 %v2115, 1e-06
        %v2148 = vadd.f32 %v2116, 1e-06
        %v2149 = vadd.f32 %v2117, 1e-06
        %v2150 = vadd.f32 %v2118, 1e-06
        %v2151 = vadd.f32 %v2119, 1e-06
        %v2152 = vadd.f32 %v2120, 1e-06
        %v2153 = vadd.f32 %v2121, 1e-06
        %v2154 = vadd.f32 %v2122, 1e-06
        %v2155 = vadd.f32 %v2123, 1e-06
        %v2156 = vadd.f32 %v2124, 1e-06
        %v2157 = vadd.f32 %v2125, 1e-06
        %v2158 = vadd.f32 %v2126, 1e-06
        %v2159 = vadd.f32 %v2127, 1e-06
        %v2160 = vadd.f32 %v2128, 1e-06
        %v2161 = vadd.f32 %v2129, 1e-06
        %v2162 = vadd.f32 %v2130, 1e-06
        %v2163 = vadd.f32 %v2131, 1e-06
        %v2164 = vadd.f32 %v2132, 1e-06
        %v2165 = vadd.f32 %v2133, 1e-06
        %v2166 = vadd.f32 %v2134, 1e-06
        %v2167 = vadd.f32 %v2135, 1e-06
        %v2168 = vadd.f32 %v2136, 1e-06
        %v2169 = vadd.f32 %v2137, 1e-06
        %v2170 = vadd.f32 %v2138, 1e-06
        %v2171 = vadd.f32 %v2139, 1e-06
        %v2172 = vadd.f32 %v2140, 1e-06
        %v2173 = vrsqrt.pop %v2141
        %v2174 = vmul.f32 %v2141, %v2173
        %vm2175 = vcmp.eq.f32.partialorder %v2141, inf
        %v2176 = vsel %vm2175, %v2141, %v2174
        %vm2177 = vcmp.eq.f32.partialorder %v2141, 0.0
        %v2178 = vand.u32 %v2141, 2147483648
        %v2179 = vsel %vm2177, %v2178, %v2176
        %v2180 = vrsqrt.pop %v2142
        %v2181 = vmul.f32 %v2142, %v2180
        %vm2182 = vcmp.eq.f32.partialorder %v2142, inf
        %v2183 = vsel %vm2182, %v2142, %v2181
        %vm2184 = vcmp.eq.f32.partialorder %v2142, 0.0
        %v2185 = vand.u32 %v2142, 2147483648
        %v2186 = vsel %vm2184, %v2185, %v2183
        %v2187 = vrsqrt.pop %v2143
        %v2188 = vmul.f32 %v2143, %v2187
        %vm2189 = vcmp.eq.f32.partialorder %v2143, inf
        %v2190 = vsel %vm2189, %v2143, %v2188
        %vm2191 = vcmp.eq.f32.partialorder %v2143, 0.0
        %v2192 = vand.u32 %v2143, 2147483648
        %v2193 = vsel %vm2191, %v2192, %v2190
        %v2194 = vrsqrt.pop %v2144
        %v2195 = vmul.f32 %v2144, %v2194
        %vm2196 = vcmp.eq.f32.partialorder %v2144, inf
        %v2197 = vsel %vm2196, %v2144, %v2195
        %vm2198 = vcmp.eq.f32.partialorder %v2144, 0.0
        %v2199 = vand.u32 %v2144, 2147483648
        %v2200 = vsel %vm2198, %v2199, %v2197
        %v2201 = vrsqrt.pop %v2145
        %v2202 = vmul.f32 %v2145, %v2201
        %vm2203 = vcmp.eq.f32.partialorder %v2145, inf
        %v2204 = vsel %vm2203, %v2145, %v2202
        %vm2205 = vcmp.eq.f32.partialorder %v2145, 0.0
        %v2206 = vand.u32 %v2145, 2147483648
        %v2207 = vsel %vm2205, %v2206, %v2204
        %v2208 = vrsqrt.pop %v2146
        %v2209 = vmul.f32 %v2146, %v2208
        %vm2210 = vcmp.eq.f32.partialorder %v2146, inf
        %v2211 = vsel %vm2210, %v2146, %v2209
        %vm2212 = vcmp.eq.f32.partialorder %v2146, 0.0
        %v2213 = vand.u32 %v2146, 2147483648
        %v2214 = vsel %vm2212, %v2213, %v2211
        %v2215 = vrsqrt.pop %v2147
        %v2216 = vmul.f32 %v2147, %v2215
        %vm2217 = vcmp.eq.f32.partialorder %v2147, inf
        %v2218 = vsel %vm2217, %v2147, %v2216
        %vm2219 = vcmp.eq.f32.partialorder %v2147, 0.0
        %v2220 = vand.u32 %v2147, 2147483648
        %v2221 = vsel %vm2219, %v2220, %v2218
        %v2222 = vrsqrt.pop %v2148
        %v2223 = vmul.f32 %v2148, %v2222
        %vm2224 = vcmp.eq.f32.partialorder %v2148, inf
        %v2225 = vsel %vm2224, %v2148, %v2223
        %vm2226 = vcmp.eq.f32.partialorder %v2148, 0.0
        %v2227 = vand.u32 %v2148, 2147483648
        %v2228 = vsel %vm2226, %v2227, %v2225
        %v2229 = vrsqrt.pop %v2149
        %v2230 = vmul.f32 %v2149, %v2229
        %vm2231 = vcmp.eq.f32.partialorder %v2149, inf
        %v2232 = vsel %vm2231, %v2149, %v2230
        %vm2233 = vcmp.eq.f32.partialorder %v2149, 0.0
        %v2234 = vand.u32 %v2149, 2147483648
        %v2235 = vsel %vm2233, %v2234, %v2232
        %v2236 = vrsqrt.pop %v2150
        %v2237 = vmul.f32 %v2150, %v2236
        %vm2238 = vcmp.eq.f32.partialorder %v2150, inf
        %v2239 = vsel %vm2238, %v2150, %v2237
        %vm2240 = vcmp.eq.f32.partialorder %v2150, 0.0
        %v2241 = vand.u32 %v2150, 2147483648
        %v2242 = vsel %vm2240, %v2241, %v2239
        %v2243 = vrsqrt.pop %v2151
        %v2244 = vmul.f32 %v2151, %v2243
        %vm2245 = vcmp.eq.f32.partialorder %v2151, inf
        %v2246 = vsel %vm2245, %v2151, %v2244
        %vm2247 = vcmp.eq.f32.partialorder %v2151, 0.0
        %v2248 = vand.u32 %v2151, 2147483648
        %v2249 = vsel %vm2247, %v2248, %v2246
        %v2250 = vrsqrt.pop %v2152
        %v2251 = vmul.f32 %v2152, %v2250
        %vm2252 = vcmp.eq.f32.partialorder %v2152, inf
        %v2253 = vsel %vm2252, %v2152, %v2251
        %vm2254 = vcmp.eq.f32.partialorder %v2152, 0.0
        %v2255 = vand.u32 %v2152, 2147483648
        %v2256 = vsel %vm2254, %v2255, %v2253
        %v2257 = vrsqrt.pop %v2153
        %v2258 = vmul.f32 %v2153, %v2257
        %vm2259 = vcmp.eq.f32.partialorder %v2153, inf
        %v2260 = vsel %vm2259, %v2153, %v2258
        %vm2261 = vcmp.eq.f32.partialorder %v2153, 0.0
        %v2262 = vand.u32 %v2153, 2147483648
        %v2263 = vsel %vm2261, %v2262, %v2260
        %v2264 = vrsqrt.pop %v2154
        %v2265 = vmul.f32 %v2154, %v2264
        %vm2266 = vcmp.eq.f32.partialorder %v2154, inf
        %v2267 = vsel %vm2266, %v2154, %v2265
        %vm2268 = vcmp.eq.f32.partialorder %v2154, 0.0
        %v2269 = vand.u32 %v2154, 2147483648
        %v2270 = vsel %vm2268, %v2269, %v2267
        %v2271 = vrsqrt.pop %v2155
        %v2272 = vmul.f32 %v2155, %v2271
        %vm2273 = vcmp.eq.f32.partialorder %v2155, inf
        %v2274 = vsel %vm2273, %v2155, %v2272
        %vm2275 = vcmp.eq.f32.partialorder %v2155, 0.0
        %v2276 = vand.u32 %v2155, 2147483648
        %v2277 = vsel %vm2275, %v2276, %v2274
        %v2278 = vrsqrt.pop %v2156
        %v2279 = vmul.f32 %v2156, %v2278
        %vm2280 = vcmp.eq.f32.partialorder %v2156, inf
        %v2281 = vsel %vm2280, %v2156, %v2279
        %vm2282 = vcmp.eq.f32.partialorder %v2156, 0.0
        %v2283 = vand.u32 %v2156, 2147483648
        %v2284 = vsel %vm2282, %v2283, %v2281
        %v2285 = vrsqrt.pop %v2157
        %v2286 = vmul.f32 %v2157, %v2285
        %vm2287 = vcmp.eq.f32.partialorder %v2157, inf
        %v2288 = vsel %vm2287, %v2157, %v2286
        %vm2289 = vcmp.eq.f32.partialorder %v2157, 0.0
        %v2290 = vand.u32 %v2157, 2147483648
        %v2291 = vsel %vm2289, %v2290, %v2288
        %v2292 = vrsqrt.pop %v2158
        %v2293 = vmul.f32 %v2158, %v2292
        %vm2294 = vcmp.eq.f32.partialorder %v2158, inf
        %v2295 = vsel %vm2294, %v2158, %v2293
        %vm2296 = vcmp.eq.f32.partialorder %v2158, 0.0
        %v2297 = vand.u32 %v2158, 2147483648
        %v2298 = vsel %vm2296, %v2297, %v2295
        %v2299 = vrsqrt.pop %v2159
        %v2300 = vmul.f32 %v2159, %v2299
        %vm2301 = vcmp.eq.f32.partialorder %v2159, inf
        %v2302 = vsel %vm2301, %v2159, %v2300
        %vm2303 = vcmp.eq.f32.partialorder %v2159, 0.0
        %v2304 = vand.u32 %v2159, 2147483648
        %v2305 = vsel %vm2303, %v2304, %v2302
        %v2306 = vrsqrt.pop %v2160
        %v2307 = vmul.f32 %v2160, %v2306
        %vm2308 = vcmp.eq.f32.partialorder %v2160, inf
        %v2309 = vsel %vm2308, %v2160, %v2307
        %vm2310 = vcmp.eq.f32.partialorder %v2160, 0.0
        %v2311 = vand.u32 %v2160, 2147483648
        %v2312 = vsel %vm2310, %v2311, %v2309
        %v2313 = vrsqrt.pop %v2161
        %v2314 = vmul.f32 %v2161, %v2313
        %vm2315 = vcmp.eq.f32.partialorder %v2161, inf
        %v2316 = vsel %vm2315, %v2161, %v2314
        %vm2317 = vcmp.eq.f32.partialorder %v2161, 0.0
        %v2318 = vand.u32 %v2161, 2147483648
        %v2319 = vsel %vm2317, %v2318, %v2316
        %v2320 = vrsqrt.pop %v2162
        %v2321 = vmul.f32 %v2162, %v2320
        %vm2322 = vcmp.eq.f32.partialorder %v2162, inf
        %v2323 = vsel %vm2322, %v2162, %v2321
        %vm2324 = vcmp.eq.f32.partialorder %v2162, 0.0
        %v2325 = vand.u32 %v2162, 2147483648
        %v2326 = vsel %vm2324, %v2325, %v2323
        %v2327 = vrsqrt.pop %v2163
        %v2328 = vmul.f32 %v2163, %v2327
        %vm2329 = vcmp.eq.f32.partialorder %v2163, inf
        %v2330 = vsel %vm2329, %v2163, %v2328
        %vm2331 = vcmp.eq.f32.partialorder %v2163, 0.0
        %v2332 = vand.u32 %v2163, 2147483648
        %v2333 = vsel %vm2331, %v2332, %v2330
        %v2334 = vrsqrt.pop %v2164
        %v2335 = vmul.f32 %v2164, %v2334
        %vm2336 = vcmp.eq.f32.partialorder %v2164, inf
        %v2337 = vsel %vm2336, %v2164, %v2335
        %vm2338 = vcmp.eq.f32.partialorder %v2164, 0.0
        %v2339 = vand.u32 %v2164, 2147483648
        %v2340 = vsel %vm2338, %v2339, %v2337
        %v2341 = vrsqrt.pop %v2165
        %v2342 = vmul.f32 %v2165, %v2341
        %vm2343 = vcmp.eq.f32.partialorder %v2165, inf
        %v2344 = vsel %vm2343, %v2165, %v2342
        %vm2345 = vcmp.eq.f32.partialorder %v2165, 0.0
        %v2346 = vand.u32 %v2165, 2147483648
        %v2347 = vsel %vm2345, %v2346, %v2344
        %v2348 = vrsqrt.pop %v2166
        %v2349 = vmul.f32 %v2166, %v2348
        %vm2350 = vcmp.eq.f32.partialorder %v2166, inf
        %v2351 = vsel %vm2350, %v2166, %v2349
        %vm2352 = vcmp.eq.f32.partialorder %v2166, 0.0
        %v2353 = vand.u32 %v2166, 2147483648
        %v2354 = vsel %vm2352, %v2353, %v2351
        %v2355 = vrsqrt.pop %v2167
        %v2356 = vmul.f32 %v2167, %v2355
        %vm2357 = vcmp.eq.f32.partialorder %v2167, inf
        %v2358 = vsel %vm2357, %v2167, %v2356
        %vm2359 = vcmp.eq.f32.partialorder %v2167, 0.0
        %v2360 = vand.u32 %v2167, 2147483648
        %v2361 = vsel %vm2359, %v2360, %v2358
        %v2362 = vrsqrt.pop %v2168
        %v2363 = vmul.f32 %v2168, %v2362
        %vm2364 = vcmp.eq.f32.partialorder %v2168, inf
        %v2365 = vsel %vm2364, %v2168, %v2363
        %vm2366 = vcmp.eq.f32.partialorder %v2168, 0.0
        %v2367 = vand.u32 %v2168, 2147483648
        %v2368 = vsel %vm2366, %v2367, %v2365
        %v2369 = vrsqrt.pop %v2169
        %v2370 = vmul.f32 %v2169, %v2369
        %vm2371 = vcmp.eq.f32.partialorder %v2169, inf
        %v2372 = vsel %vm2371, %v2169, %v2370
        %vm2373 = vcmp.eq.f32.partialorder %v2169, 0.0
        %v2374 = vand.u32 %v2169, 2147483648
        %v2375 = vsel %vm2373, %v2374, %v2372
        %v2376 = vrsqrt.pop %v2170
        %v2377 = vmul.f32 %v2170, %v2376
        %vm2378 = vcmp.eq.f32.partialorder %v2170, inf
        %v2379 = vsel %vm2378, %v2170, %v2377
        %vm2380 = vcmp.eq.f32.partialorder %v2170, 0.0
        %v2381 = vand.u32 %v2170, 2147483648
        %v2382 = vsel %vm2380, %v2381, %v2379
        %v2383 = vrsqrt.pop %v2171
        %v2384 = vmul.f32 %v2171, %v2383
        %vm2385 = vcmp.eq.f32.partialorder %v2171, inf
        %v2386 = vsel %vm2385, %v2171, %v2384
        %vm2387 = vcmp.eq.f32.partialorder %v2171, 0.0
        %v2388 = vand.u32 %v2171, 2147483648
        %v2389 = vsel %vm2387, %v2388, %v2386
        %v2390 = vrsqrt.pop %v2172
        %v2391 = vmul.f32 %v2172, %v2390
        %vm2392 = vcmp.eq.f32.partialorder %v2172, inf
        %v2393 = vsel %vm2392, %v2172, %v2391
        %vm2394 = vcmp.eq.f32.partialorder %v2172, 0.0
        %v2395 = vand.u32 %v2172, 2147483648
        %v2396 = vsel %vm2394, %v2395, %v2393
        %v2397 = vld [vmem:[%s2] sm:$0xff]
        %v2398 = vld [vmem:[%s2 + $0x8] sm:$0xff]
        %v2399 = vld [vmem:[%s2 + $0x10] sm:$0xff]
        %v2400 = vld [vmem:[%s2 + $0x18] sm:$0xff]
        %v2401 = vld [vmem:[%s2 + $0x20] sm:$0xff]
        %v2402 = vld [vmem:[%s2 + $0x28] sm:$0xff]
        %v2403 = vld [vmem:[%s2 + $0x30] sm:$0xff]
        %v2404 = vld [vmem:[%s2 + $0x38] sm:$0xff]
        %v2405 = vld [vmem:[%s2 + $0x40] sm:$0xff]
        %v2406 = vld [vmem:[%s2 + $0x48] sm:$0xff]
        %v2407 = vld [vmem:[%s2 + $0x50] sm:$0xff]
        %v2408 = vld [vmem:[%s2 + $0x58] sm:$0xff]
        %v2409 = vld [vmem:[%s2 + $0x60] sm:$0xff]
        %v2410 = vld [vmem:[%s2 + $0x68] sm:$0xff]
        %v2411 = vld [vmem:[%s2 + $0x70] sm:$0xff]
        %v2412 = vld [vmem:[%s2 + $0x78] sm:$0xff]
        %v2413 = vld [vmem:[%s2 + $0x80] sm:$0xff]
        %v2414 = vld [vmem:[%s2 + $0x88] sm:$0xff]
        %v2415 = vld [vmem:[%s2 + $0x90] sm:$0xff]
        %v2416 = vld [vmem:[%s2 + $0x98] sm:$0xff]
        %v2417 = vld [vmem:[%s2 + $0xa0] sm:$0xff]
        %v2418 = vld [vmem:[%s2 + $0xa8] sm:$0xff]
        %v2419 = vld [vmem:[%s2 + $0xb0] sm:$0xff]
        %v2420 = vld [vmem:[%s2 + $0xb8] sm:$0xff]
        %v2421 = vld [vmem:[%s2 + $0xc0] sm:$0xff]
        %v2422 = vld [vmem:[%s2 + $0xc8] sm:$0xff]
        %v2423 = vld [vmem:[%s2 + $0xd0] sm:$0xff]
        %v2424 = vld [vmem:[%s2 + $0xd8] sm:$0xff]
        %v2425 = vld [vmem:[%s2 + $0xe0] sm:$0xff]
        %v2426 = vld [vmem:[%s2 + $0xe8] sm:$0xff]
        %v2427 = vld [vmem:[%s2 + $0xf0] sm:$0xff]
        %v2428 = vld [vmem:[%s2 + $0xf8] sm:$0xff]
        %2429 = vmatprep.subr.mxu0 0.0
        %2430 = vmatpush1.msra.mxu0 %v2397
        %2431 = vmatprep.subr.mxu0 0.0
        %2432 = vmatpush1.msra.mxu0 %v2398
        %2433 = vmatprep.subr.mxu0 0.0
        %2434 = vmatpush1.msra.mxu0 %v2399
        %2435 = vmatprep.subr.mxu0 0.0
        %2436 = vmatpush1.msra.mxu0 %v2400
        %2437 = vmatprep.subr.mxu0 0.0
        %2438 = vmatpush1.msra.mxu0 %v2401
        %2439 = vmatprep.subr.mxu0 0.0
        %2440 = vmatpush1.msra.mxu0 %v2402
        %2441 = vmatprep.subr.mxu0 0.0
        %2442 = vmatpush1.msra.mxu0 %v2403
        %2443 = vmatprep.subr.mxu0 0.0
        %2444 = vmatpush1.msra.mxu0 %v2404
        %2445 = vmatprep.subr.mxu0 0.0
        %2446 = vmatpush1.msra.mxu0 %v2405
        %2447 = vmatprep.subr.mxu0 0.0
        %2448 = vmatpush1.msra.mxu0 %v2406
        %2449 = vmatprep.subr.mxu0 0.0
        %2450 = vmatpush1.msra.mxu0 %v2407
        %2451 = vmatprep.subr.mxu0 0.0
        %2452 = vmatpush1.msra.mxu0 %v2408
        %2453 = vmatprep.subr.mxu0 0.0
        %2454 = vmatpush1.msra.mxu0 %v2409
        %2455 = vmatprep.subr.mxu0 0.0
        %2456 = vmatpush1.msra.mxu0 %v2410
        %2457 = vmatprep.subr.mxu0 0.0
        %2458 = vmatpush1.msra.mxu0 %v2411
        %2459 = vmatprep.subr.mxu0 0.0
        %2460 = vmatpush1.msra.mxu0 %v2412
        %2461 = vmatprep.subr.mxu0 0.0
        %2462 = vmatpush1.msra.mxu0 %v2413
        %2463 = vmatprep.subr.mxu0 0.0
        %2464 = vmatpush1.msra.mxu0 %v2414
        %2465 = vmatprep.subr.mxu0 0.0
        %2466 = vmatpush1.msra.mxu0 %v2415
        %2467 = vmatprep.subr.mxu0 0.0
        %2468 = vmatpush1.msra.mxu0 %v2416
        %2469 = vmatprep.subr.mxu0 0.0
        %2470 = vmatpush1.msra.mxu0 %v2417
        %2471 = vmatprep.subr.mxu0 0.0
        %2472 = vmatpush1.msra.mxu0 %v2418
        %2473 = vmatprep.subr.mxu0 0.0
        %2474 = vmatpush1.msra.mxu0 %v2419
        %2475 = vmatprep.subr.mxu0 0.0
        %2476 = vmatpush1.msra.mxu0 %v2420
        %2477 = vmatprep.subr.mxu0 0.0
        %2478 = vmatpush1.msra.mxu0 %v2421
        %2479 = vmatprep.subr.mxu0 0.0
        %2480 = vmatpush1.msra.mxu0 %v2422
        %2481 = vmatprep.subr.mxu0 0.0
        %2482 = vmatpush1.msra.mxu0 %v2423
        %2483 = vmatprep.subr.mxu0 0.0
        %2484 = vmatpush1.msra.mxu0 %v2424
        %2485 = vmatprep.subr.mxu0 0.0
        %2486 = vmatpush1.msra.mxu0 %v2425
        %2487 = vmatprep.subr.mxu0 0.0
        %2488 = vmatpush1.msra.mxu0 %v2426
        %2489 = vmatprep.subr.mxu0 0.0
        %2490 = vmatpush1.msra.mxu0 %v2427
        %2491 = vmatprep.subr.mxu0 0.0
        %2492 = vmatpush1.msra.mxu0 %v2428
        %2493 = vmatprep.mubr.f32.mxu0 %v2186
        %2494 = vmatmul.mubr.f32.gmra.mrb[0].mxu0 %v2179
        %v2495 = vpop.f32.mrb[0].mxu0
        %v2496 = vadd.f32 0.0, %v2495
        %v2497 = vpop.f32.mrb[0].mxu0
        %2498 = vmatprep.mubr.f32.mxu0 %v2200
        %2499 = vmatmul.mubr.f32.gmra.mrb[0].mxu0 %v2193
        %v2500 = vpop.f32.mrb[0].mxu0
        %v2501 = vadd.f32 0.0, %v2500
        %v2502 = vpop.f32.mrb[0].mxu0
        %2503 = vmatprep.mubr.f32.mxu0 %v2214
        %2504 = vmatmul.mubr.f32.gmra.mrb[0].mxu0 %v2207
        %v2505 = vpop.f32.mrb[0].mxu0
        %v2506 = vadd.f32 0.0, %v2505
        %v2507 = vpop.f32.mrb[0].mxu0
        %2508 = vmatprep.mubr.f32.mxu0 %v2228
        %2509 = vmatmul.mubr.f32.gmra.mrb[0].mxu0 %v2221
        %v2510 = vpop.f32.mrb[0].mxu0
        %v2511 = vadd.f32 0.0, %v2510
        %v2512 = vpop.f32.mrb[0].mxu0
        %2513 = vmatprep.mubr.f32.mxu0 %v2242
        %2514 = vmatmul.mubr.f32.gmra.mrb[0].mxu0 %v2235
        %v2515 = vpop.f32.mrb[0].mxu0
        %v2516 = vadd.f32 0.0, %v2515
        %v2517 = vpop.f32.mrb[0].mxu0
        %2518 = vmatprep.mubr.f32.mxu0 %v2256
        %2519 = vmatmul.mubr.f32.gmra.mrb[0].mxu0 %v2249
        %v2520 = vpop.f32.mrb[0].mxu0
        %v2521 = vadd.f32 0.0, %v2520
        %v2522 = vpop.f32.mrb[0].mxu0
        %2523 = vmatprep.mubr.f32.mxu0 %v2270
        %2524 = vmatmul.mubr.f32.gmra.mrb[0].mxu0 %v2263
        %v2525 = vpop.f32.mrb[0].mxu0
        %v2526 = vadd.f32 0.0, %v2525
        %v2527 = vpop.f32.mrb[0].mxu0
        %2528 = vmatprep.mubr.f32.mxu0 %v2284
        %2529 = vmatmul.mubr.f32.gmra.mrb[0].mxu0 %v2277
        %v2530 = vpop.f32.mrb[0].mxu0
        %v2531 = vadd.f32 0.0, %v2530
        %v2532 = vpop.f32.mrb[0].mxu0
        %2533 = vmatprep.mubr.f32.mxu0 %v2298
        %2534 = vmatmul.mubr.f32.gmra.mrb[0].mxu0 %v2291
        %v2535 = vpop.f32.mrb[0].mxu0
        %v2536 = vadd.f32 0.0, %v2535
        %v2537 = vpop.f32.mrb[0].mxu0
        %2538 = vmatprep.mubr.f32.mxu0 %v2312
        %2539 = vmatmul.mubr.f32.gmra.mrb[0].mxu0 %v2305
        %v2540 = vpop.f32.mrb[0].mxu0
        %v2541 = vadd.f32 0.0, %v2540
        %v2542 = vpop.f32.mrb[0].mxu0
        %2543 = vmatprep.mubr.f32.mxu0 %v2326
        %2544 = vmatmul.mubr.f32.gmra.mrb[0].mxu0 %v2319
        %v2545 = vpop.f32.mrb[0].mxu0
        %v2546 = vadd.f32 0.0, %v2545
        %v2547 = vpop.f32.mrb[0].mxu0
        %2548 = vmatprep.mubr.f32.mxu0 %v2340
        %2549 = vmatmul.mubr.f32.gmra.mrb[0].mxu0 %v2333
        %v2550 = vpop.f32.mrb[0].mxu0
        %v2551 = vadd.f32 0.0, %v2550
        %v2552 = vpop.f32.mrb[0].mxu0
        %2553 = vmatprep.mubr.f32.mxu0 %v2354
        %2554 = vmatmul.mubr.f32.gmra.mrb[0].mxu0 %v2347
        %v2555 = vpop.f32.mrb[0].mxu0
        %v2556 = vadd.f32 0.0, %v2555
        %v2557 = vpop.f32.mrb[0].mxu0
        %2558 = vmatprep.mubr.f32.mxu0 %v2368
        %2559 = vmatmul.mubr.f32.gmra.mrb[0].mxu0 %v2361
        %v2560 = vpop.f32.mrb[0].mxu0
        %v2561 = vadd.f32 0.0, %v2560
        %v2562 = vpop.f32.mrb[0].mxu0
        %2563 = vmatprep.mubr.f32.mxu0 %v2382
        %2564 = vmatmul.mubr.f32.gmra.mrb[0].mxu0 %v2375
        %v2565 = vpop.f32.mrb[0].mxu0
        %v2566 = vadd.f32 0.0, %v2565
        %v2567 = vpop.f32.mrb[0].mxu0
        %2568 = vmatprep.mubr.f32.mxu0 %v2396
        %2569 = vmatmul.mubr.f32.gmra.mrb[0].mxu0 %v2389
        %v2570 = vpop.f32.mrb[0].mxu0
        %v2571 = vadd.f32 0.0, %v2570
        %v2572 = vpop.f32.mrb[0].mxu0
        %2573 = vdwg.mxu0
        %2574 = vst [vmem:[%s151] sm:$0xff] %v2496
        %2575 = vst [vmem:[%s151 + $0x8] sm:$0xff] %v2501
        %2576 = vst [vmem:[%s151 + $0x10] sm:$0xff] %v2506
        %2577 = vst [vmem:[%s151 + $0x18] sm:$0xff] %v2511
        %2578 = vst [vmem:[%s151 + $0x20] sm:$0xff] %v2516
        %2579 = vst [vmem:[%s151 + $0x28] sm:$0xff] %v2521
        %2580 = vst [vmem:[%s151 + $0x30] sm:$0xff] %v2526
        %2581 = vst [vmem:[%s151 + $0x38] sm:$0xff] %v2531
        %2582 = vst [vmem:[%s151 + $0x40] sm:$0xff] %v2536
        %2583 = vst [vmem:[%s151 + $0x48] sm:$0xff] %v2541
        %2584 = vst [vmem:[%s151 + $0x50] sm:$0xff] %v2546
        %2585 = vst [vmem:[%s151 + $0x58] sm:$0xff] %v2551
        %2586 = vst [vmem:[%s151 + $0x60] sm:$0xff] %v2556
        %2587 = vst [vmem:[%s151 + $0x68] sm:$0xff] %v2561
        %2588 = vst [vmem:[%s151 + $0x70] sm:$0xff] %v2566
        %2589 = vst [vmem:[%s151 + $0x78] sm:$0xff] %v2571
        %s2590 = sand.u32 %s82, 1
        %s2591 = scalar_lea.sflag [#allocation6], %s2590
        %s2592 = sand.u32 %s82, 1
        %s2593 = smul.addr %s2592, 128
        %s2594 = scalar_lea.vmem [#allocation7], %s2593
        // Predicated region
        $region70: #{tpu_custom_call.1} parent=27 // pred_check
          %p2595 = pneg %p92
        $region71: #{tpu_custom_call.1} parent=27 // pred_check_branch
          %2597 = sbr.rel (%p2595) target = $region73
        $region72: #{tpu_custom_call.1} parent=27 // pred_region
          %s2598 = smul.u32 16, %s23
          %s2600 = ssub.s32 2048, 2048
          %2601 = vsyncadd %s2591, %s2600
          %s2602 = smul.addr %s22, 16
          %s2603 = sadd.s32 %s2598, %s2602
          %s2604 = smul.addr %s2603, 128
          %s2605 = scalar_lea.hbm %s3, %s2604
          %s2606 = sshll.u32 %s2594, 4
          %s2607 = int_to_ptr.vmem [resolvable:$true] %s2606
          %2612 = dma.vmem_to_hbm [thread:$0]  %s2607, 2048, %s2605, %s2591, 128, 128, 8
        $region73: #{tpu_custom_call.1} parent=27 // pred_fallthru
          _
      $region28: #{tpu_custom_call.1} parent=5 // pred_fallthru
        _
      %p2613 = scmp.le.s32.totalorder 2, %s13
      // Predicated region
      $region74: #{tpu_custom_call.1} parent=5 // pred_check
        %p2614 = pneg %p2613
      $region75: #{tpu_custom_call.1} parent=5 // pred_check_branch
        %2616 = sbr.rel (%p2614) target = $region77
      $region76: #{tpu_custom_call.1} parent=5 // pred_region
        %s2617 = ssub.s32 %s13, 2
        // Predicated region
        $region78: #{tpu_custom_call.1} parent=76 // pred_check
          %p2618 = pneg %p98
        $region79: #{tpu_custom_call.1} parent=76 // pred_check_branch
          %2620 = sbr.rel (%p2618) target = $region81
        $region80: #{tpu_custom_call.1} parent=76 // pred_region
          %s2621 = sand.u32 %s83, 1
          %s2622 = scalar_lea.sflag [#allocation6], %s2621
          %s2623 = sand.u32 %s83, 1
          %s2624 = smul.addr %s2623, 128
          %s2625 = scalar_lea.vmem [#allocation7], %s2624
          %2626 = dma.done %s2622, 2048
        $region81: #{tpu_custom_call.1} parent=76 // pred_fallthru
          _
      $region77: #{tpu_custom_call.1} parent=5 // pred_fallthru
        _
    $region6: #{tpu_custom_call.1} parent=1 // loop_footer
      %s17 = sadd.s32 1, %s13
    $region7: #{tpu_custom_call.1} parent=1 // loop_footer_branch
      %12 = sbr.rel target = $region3
    $region8: #{tpu_custom_call.1} parent=1 // loop_exit
      _
    %2627 = vsyncpa [#allocation5], 1
    %s2628 = scalar_lea.sflag [#allocation5], 1
    %2629 = vsyncpa %s2628, 1
    %2630 = vsyncpa [#allocation6], 1
    %s2631 = scalar_lea.sflag [#allocation6], 1
    %2632 = vsyncpa %s2631, 1
  %2633 = vsyncmov [#allocation3]
  %s2634 = vpop.sfrf %2633
  %p2635 = scmp.eq.s32.totalorder %s2634, 0
  %p2636 = pneg %p2635
  %2638 = shalt.err (%p2636)

</llo_original>
